<compile_context>
chip_gen: v7x
topology: tpu7x:2x2x1
jax: 0.10.0
libtpu: 0.0.40
codegen_flags: <defaults>
</compile_context>

<pallas_src>
import functools

import jax
import jax.numpy as jnp
import numpy as np
from jax.experimental import pallas as pl
from jax.experimental.pallas import tpu as pltpu


# ---------------------------------------------------------------------------
# In-kernel helpers: per-image row shifts on (M, K) slabs, M = bb*H rows laid out
# image-major (H consecutive rows per image).  The shifted-in row at every image
# boundary is zero (the 3x3 conv's height padding).  These operate on narrow f32
# band partials only, so the copies are small.
# ---------------------------------------------------------------------------
def _shift_down(a, h):
    """out[r] = a[r-1] within each image; 0 on each image's first row."""
    shifted = jnp.concatenate([jnp.zeros((1, a.shape[1]), a.dtype), a[:-1, :]], axis=0)
    row = jax.lax.broadcasted_iota(jnp.int32, a.shape, 0)
    return jnp.where(row % h == 0, jnp.zeros_like(a), shifted)


def _shift_up(a, h):
    """out[r] = a[r+1] within each image; 0 on each image's last row."""
    shifted = jnp.concatenate([a[1:, :], jnp.zeros((1, a.shape[1]), a.dtype)], axis=0)
    row = jax.lax.broadcasted_iota(jnp.int32, a.shape, 0)
    return jnp.where(row % h == h - 1, jnp.zeros_like(a), shifted)


# ---------------------------------------------------------------------------
# Fused kernel: one grid step == bb images
# ---------------------------------------------------------------------------
def _upblock_kernel(x_ref, s_ref,
                    wup_ref, bup_ref,
                    w1s_ref, w1u_ref, b1_ref,
                    w2_ref, scale_ref, shift_ref,
                    out_ref, *, h):
    f32, bf16 = jnp.float32, jnp.bfloat16
    m = x_ref.shape[0]                       # bb*H rows (one parity, image-major)

    # ---- ConvTranspose2d(k=2, s=2): two matmuls, one per output-row parity ------
    x = x_ref[...]                                                  # (M, W*Cin) bf16
    bup = bup_ref[...]
    u_e = jnp.dot(x, wup_ref[0], preferred_element_type=f32) + bup  # up rows 2i
    u_o = jnp.dot(x, wup_ref[1], preferred_element_type=f32) + bup  # up rows 2i+1
    u = jnp.concatenate([u_e, u_o], axis=0).astype(bf16)            # (2M, Lout) stacked

    s = s_ref[...]                                                  # (2M, Ls) stacked skips

    # ---- conv1 (3x3, pad=1) on cat([skips, up], C): per-band accumulated dots ---
    # Band a maps input row p+a-1 -> output row p.  The channel concat is removed by
    # keeping separate skip / upconv weights; even & odd output rows share each band
    # matmul via the parity row-stacked slabs (halves sliced at a sublane boundary).
    p0 = (jnp.dot(s, w1s_ref[0], preferred_element_type=f32)
          + jnp.dot(u, w1u_ref[0], preferred_element_type=f32))
    p1 = (jnp.dot(s, w1s_ref[1], preferred_element_type=f32)
          + jnp.dot(u, w1u_ref[1], preferred_element_type=f32))
    p2 = (jnp.dot(s, w1s_ref[2], preferred_element_type=f32)
          + jnp.dot(u, w1u_ref[2], preferred_element_type=f32))
    b1 = b1_ref[...]
    h1_e = jnp.maximum(_shift_down(p0[m:], h) + p1[:m] + p2[m:] + b1, 0.0)
    h1_o = jnp.maximum(p0[:m] + p1[m:] + _shift_up(p2[:m], h) + b1, 0.0)
    h1 = jnp.concatenate([h1_e, h1_o], axis=0).astype(bf16)         # (2M, Lout)

    # ---- conv2 (3x3, pad=1): same per-band scheme, parity-fused matmuls ---------
    q0 = jnp.dot(h1, w2_ref[0], preferred_element_type=f32)
    q1 = jnp.dot(h1, w2_ref[1], preferred_element_type=f32)
    q2 = jnp.dot(h1, w2_ref[2], preferred_element_type=f32)
    o_e = _shift_down(q0[m:], h) + q1[:m] + q2[m:]
    o_o = q0[:m] + q1[m:] + _shift_up(q2[:m], h)

    # ---- bias+BatchNorm(eval) folded into scale/shift, ReLU.  Even/odd rows are
    # packed side-by-side in lanes (2*Lout = 128 here) -> lane-dense store. --------
    o = jnp.concatenate([o_e, o_o], axis=-1)                        # (M, 2*Lout)
    out_ref[...] = jnp.maximum(o * scale_ref[...] + shift_ref[...], 0.0
                               ).astype(out_ref.dtype)


# ---------------------------------------------------------------------------
# Host-side weight packing (pure layout plumbing, done once per call)
# ---------------------------------------------------------------------------
def _conv_band_mats(wt, wd):
    """3x3 'same' conv (torch cross-correlation, pad=1) in lane-packed layout.
    wt: (Co, Ci, 3, 3).  Returns [W_0, W_1, W_2], each (wd*Ci, wd*Co), such that
    out_row[p] = sum_a in_row[p + a - 1] @ W_a  (rows outside the image are zero)."""
    co, ci, _, _ = wt.shape
    q = jnp.arange(wd)[:, None]     # input column
    j = jnp.arange(wd)[None, :]     # output column
    mats = []
    for a in range(3):
        m = jnp.zeros((wd, ci, wd, co), jnp.float32)
        for b in range(3):
            ind = (q == j + b - 1).astype(jnp.float32)          # banded indicator
            m = m + jnp.einsum("qj,oc->qcjo", ind, wt[:, :, a, b].astype(jnp.float32))
        mats.append(m.reshape(wd * ci, wd * co))
    return mats


def _upconv_phase_mats(wup, w_in):
    """ConvTranspose2d(k=2, s=2) in lane-packed layout.
    wup: (Cin, Cout, 2, 2).  Returns [M_0, M_1], each (w_in*Cin, 2*w_in*Cout):
    up_rows(phase dy) = x_rows @ M_dy, with output lane index (2j+dx)*Cout + co."""
    cin, cout, _, _ = wup.shape
    jj = jnp.arange(w_in)[:, None]          # input column
    qq = jnp.arange(2 * w_in)[None, :]      # output column
    mats = []
    for dy in range(2):
        m = jnp.zeros((w_in, cin, 2 * w_in, cout), jnp.float32)
        for dx in range(2):
            ind = (qq == 2 * jj + dx).astype(jnp.float32)
            m = m + jnp.einsum("jq,co->jcqo", ind, wup[:, :, dy, dx].astype(jnp.float32))
        mats.append(m.reshape(w_in * cin, 2 * w_in * cout))
    return mats


# ---------------------------------------------------------------------------
# UpBlock forward (eval mode)
# ---------------------------------------------------------------------------
def upblock_forward(x_nchw, skips_nchw, params, *, batch_block=None):
    eps = 1e-5
    n, cin, h, w = x_nchw.shape
    cskip = skips_nchw.shape[1]
    cout = params["up_b"].shape[0]
    assert skips_nchw.shape == (n, cskip, 2 * h, 2 * w)
    assert params["c1_w"].shape[1] == cskip + cout, "concat channels must match conv1"

    hh, ww = 2 * h, 2 * w
    lin, ls, lout = w * cin, ww * cskip, ww * cout

    # ---- batch block: fatten the matmul M dimension (rows per parity = bb*h) ----
    if batch_block is None:
        target = max(h, 128)      # ~128 rows per parity -> 256-row parity-fused matmuls
        batch_block = 1
        for b in range(1, n + 1):
            if n % b == 0 and b * h <= target:
                batch_block = b
    bb = batch_block
    nb = n // bb
    m = bb * h
    assert (m % 8 == 0) or (nb == 1), "batch_block*h must be sublane-aligned"

    # ---- inputs: one fused transpose+cast pass each (layout plumbing only) ------
    x_rows = (x_nchw.transpose(0, 2, 3, 1)
              .reshape(n * h, lin).astype(jnp.bfloat16))                   # (n*h, lin)
    # skips: per block -> [even rows of bb images (image-major) ; odd rows of same]
    s_pack = (skips_nchw
              .reshape(nb, bb, cskip, h, 2, ww)
              .transpose(0, 4, 1, 3, 5, 2)            # (nb, parity, bb, h, ww, cskip)
              .reshape(nb * 2 * m, ls).astype(jnp.bfloat16))

    # ---- packed weights (bf16 MXU operands) and folded f32 epilogue vectors -----
    wup = jnp.stack(_upconv_phase_mats(params["up_w"], w), 0).astype(jnp.bfloat16)
    bup = jnp.tile(params["up_b"], ww).reshape(1, lout).astype(jnp.float32)

    w1s = jnp.stack(_conv_band_mats(params["c1_w"][:, :cskip], ww), 0).astype(jnp.bfloat16)
    w1u = jnp.stack(_conv_band_mats(params["c1_w"][:, cskip:], ww), 0).astype(jnp.bfloat16)
    b1 = jnp.tile(params["c1_b"], ww).reshape(1, lout).astype(jnp.float32)

    w2 = jnp.stack(_conv_band_mats(params["c2_w"], ww), 0).astype(jnp.bfloat16)
    s_ch = params["bn_gamma"] * jax.lax.rsqrt(params["bn_var"] + eps)
    sh_ch = params["bn_beta"] + (params["c2_b"] - params["bn_mean"]) * s_ch
    scale2 = jnp.tile(s_ch, 2 * ww).reshape(1, 2 * lout).astype(jnp.float32)
    shift2 = jnp.tile(sh_ch, 2 * ww).reshape(1, 2 * lout).astype(jnp.float32)

    # ---- BlockSpecs -------------------------------------------------------------
    def resident(arr):            # grid-invariant weight / vector blocks
        nd = arr.ndim
        return pl.BlockSpec(arr.shape, lambda i, nd=nd: (0,) * nd)

    x_spec = pl.BlockSpec((m, lin), lambda i: (i, 0))
    s_spec = pl.BlockSpec((2 * m, ls), lambda i: (i, 0))
    o_spec = pl.BlockSpec((m, 2 * lout), lambda i: (i, 0))

    # ---- VMEM limit per generation (v5e/v6e ~96 MiB, v7x ~48 MiB) ----------------
    try:
        phys = int(pltpu.get_tpu_info().vmem_capacity_bytes)
    except Exception:
        phys = 128 * 1024 * 1024
    vmem_limit = min(100 * 1024 * 1024, (phys * 3) // 4)

    out_flat = pl.pallas_call(
        functools.partial(_upblock_kernel, h=h),
        grid=(nb,),
        in_specs=[x_spec, s_spec,
                  resident(wup), resident(bup),
                  resident(w1s), resident(w1u), resident(b1),
                  resident(w2), resident(scale2), resident(shift2)],
        out_specs=o_spec,
        out_shape=jax.ShapeDtypeStruct((n * h, 2 * lout), jnp.float32),
        compiler_params=pltpu.CompilerParams(
            dimension_semantics=("parallel",),      # batch blocks across TCs (megacore)
            vmem_limit_bytes=vmem_limit),
    )(x_rows, s_pack, wup, bup, w1s, w1u, b1, w2, scale2, shift2)

    # ---- output: (n*h, [even-row | odd-row] lanes) -> NCHW (one transpose pass) --
    out = out_flat.reshape(n, hh, ww, cout)
    return jnp.transpose(out, (0, 3, 1, 2))


# ---------------------------------------------------------------------------
# Pure-JAX reference (independent of the kernel's packing algebra)
# ---------------------------------------------------------------------------
def upblock_reference(x_nchw, skips_nchw, params):
    eps = 1e-5
    x = jnp.transpose(x_nchw, (0, 2, 3, 1)).astype(jnp.float32)
    s = jnp.transpose(skips_nchw, (0, 2, 3, 1)).astype(jnp.float32)
    n, h, w, _ = x.shape
    cout = params["up_b"].shape[0]
    up = jnp.einsum("nhwc,codx->nhdwxo", x, params["up_w"])
    up = up.reshape(n, 2 * h, 2 * w, cout) + params["up_b"]
    z = jnp.concatenate([s, up], axis=-1)
    dn = ("NHWC", "HWIO", "NHWC")
    w1 = jnp.transpose(params["c1_w"], (2, 3, 1, 0))
    h1 = jax.nn.relu(jax.lax.conv_general_dilated(z, w1, (1, 1), "SAME",
                                                  dimension_numbers=dn) + params["c1_b"])
    w2 = jnp.transpose(params["c2_w"], (2, 3, 1, 0))
    h2 = jax.lax.conv_general_dilated(h1, w2, (1, 1), "SAME",
                                      dimension_numbers=dn) + params["c2_b"]
    h2 = (h2 - params["bn_mean"]) * jax.lax.rsqrt(params["bn_var"] + eps) \
        * params["bn_gamma"] + params["bn_beta"]
    return jnp.transpose(jax.nn.relu(h2), (0, 3, 1, 2))


# ---------------------------------------------------------------------------
# Deterministic parameter init (shapes from UpBlock(inchannels=8, outchannels=4))
# ---------------------------------------------------------------------------
def init_params(key, inchannels, outchannels):
    ks = jax.random.split(key, 8)
    return {
        "up_w": 0.1 * jax.random.normal(ks[0], (inchannels, outchannels, 2, 2), jnp.float32),
        "up_b": 0.1 * jax.random.normal(ks[1], (outchannels,), jnp.float32),
        "c1_w": 0.1 * jax.random.normal(ks[2], (outchannels, inchannels, 3, 3), jnp.float32),
        "c1_b": 0.1 * jax.random.normal(ks[3], (outchannels,), jnp.float32),
        "c2_w": 0.1 * jax.random.normal(ks[4], (outchannels, outchannels, 3, 3), jnp.float32),
        "c2_b": 0.1 * jax.random.normal(ks[5], (outchannels,), jnp.float32),
        "bn_gamma": 1.0 + 0.1 * jax.random.normal(ks[6], (outchannels,), jnp.float32),
        "bn_beta": 0.1 * jax.random.normal(ks[7], (outchannels,), jnp.float32),
        "bn_mean": jnp.linspace(-0.1, 0.1, outchannels, dtype=jnp.float32),
        "bn_var": 1.0 + jnp.linspace(0.0, 0.2, outchannels, dtype=jnp.float32),
    }


if __name__ == "__main__":
    inchannels, outchannels = 8, 4
    n, h, w = 2, 8, 8                        # upconv doubles spatial -> 16x16
    key = jax.random.PRNGKey(0)
    kx, ks, kp = jax.random.split(key, 3)
    x = jax.random.normal(kx, (n, inchannels, h, w), jnp.float32)          # NCHW
    skips = jax.random.normal(ks, (n, outchannels, 2 * h, 2 * w), jnp.float32)
    params = init_params(kp, inchannels, outchannels)

    out = jax.block_until_ready(jax.jit(upblock_forward)(x, skips, params))
    ref = jax.block_until_ready(upblock_reference(x, skips, params))

    assert out.shape == (n, outchannels, 2 * h, 2 * w), out.shape
    assert bool(jnp.all(jnp.isfinite(out)))
    assert bool(jnp.all(out >= 0.0))          # final op is ReLU
    # loose tolerance: kernel feeds bf16 operands to the MXU (f32 accumulation)
    np.testing.assert_allclose(np.asarray(out), np.asarray(ref), rtol=5e-2, atol=5e-2)
    print("KERNEL_OK")
</pallas_src>

<mosaic_0001>
module attributes {stable_mosaic.version = 11 : i64} {
  func.func @_upblock_kernel(%arg0: i32, %arg1: memref<16x64xbf16, #tpu.memory_space<vmem>>, %arg2: memref<32x64xbf16, #tpu.memory_space<vmem>>, %arg3: memref<2x64x64xbf16, #tpu.memory_space<vmem>>, %arg4: memref<1x64xf32, #tpu.memory_space<vmem>>, %arg5: memref<3x64x64xbf16, #tpu.memory_space<vmem>>, %arg6: memref<3x64x64xbf16, #tpu.memory_space<vmem>>, %arg7: memref<1x64xf32, #tpu.memory_space<vmem>>, %arg8: memref<3x64x64xbf16, #tpu.memory_space<vmem>>, %arg9: memref<1x128xf32, #tpu.memory_space<vmem>>, %arg10: memref<1x128xf32, #tpu.memory_space<vmem>>, %arg11: memref<16x128xf32, #tpu.memory_space<vmem>>) attributes {dimension_semantics = [#tpu.dimension_semantics<parallel>], iteration_bounds = array<i64: 1>, scalar_prefetch = 0 : i64, scratch_operands = 0 : i64, tpu.core_type = #tpu.core_type<tc>, window_params = [{transform_indices = @transform_0, window_bounds = array<i64: 16, 64>}, {transform_indices = @transform_1, window_bounds = array<i64: 32, 64>}, {pipeline_mode = #tpu.pipeline_mode<synchronous>, transform_indices = @transform_2, window_bounds = array<i64: 2, 64, 64>}, {pipeline_mode = #tpu.pipeline_mode<synchronous>, transform_indices = @transform_3, window_bounds = array<i64: 1, 64>}, {pipeline_mode = #tpu.pipeline_mode<synchronous>, transform_indices = @transform_4, window_bounds = array<i64: 3, 64, 64>}, {pipeline_mode = #tpu.pipeline_mode<synchronous>, transform_indices = @transform_5, window_bounds = array<i64: 3, 64, 64>}, {pipeline_mode = #tpu.pipeline_mode<synchronous>, transform_indices = @transform_6, window_bounds = array<i64: 1, 64>}, {pipeline_mode = #tpu.pipeline_mode<synchronous>, transform_indices = @transform_7, window_bounds = array<i64: 3, 64, 64>}, {pipeline_mode = #tpu.pipeline_mode<synchronous>, transform_indices = @transform_8, window_bounds = array<i64: 1, 128>}, {pipeline_mode = #tpu.pipeline_mode<synchronous>, transform_indices = @transform_9, window_bounds = array<i64: 1, 128>}, {transform_indices = @transform_10, window_bounds = array<i64: 16, 128>}]} {
    %c0 = arith.constant 0 : index
    %c0_0 = arith.constant 0 : index
    %0 = vector.load %arg1[%c0, %c0_0] : memref<16x64xbf16, #tpu.memory_space<vmem>>, vector<16x64xbf16>
    %c0_1 = arith.constant 0 : index
    %c0_2 = arith.constant 0 : index
    %1 = vector.load %arg4[%c0_1, %c0_2] : memref<1x64xf32, #tpu.memory_space<vmem>>, vector<1x64xf32>
    %c0_3 = arith.constant 0 : index
    %c0_4 = arith.constant 0 : index
    %c0_5 = arith.constant 0 : index
    %2 = vector.load %arg3[%c0_3, %c0_4, %c0_5] : memref<2x64x64xbf16, #tpu.memory_space<vmem>>, vector<1x64x64xbf16>
    %3 = vector.shape_cast %2 : vector<1x64x64xbf16> to vector<64x64xbf16>
    %cst = arith.constant dense<0.000000e+00> : vector<16x64xf32>
    %4 = tpu.matmul %0, %3, %cst {dimension_numbers = #tpu.dot_dimension_numbers<[1], [0], [0], [1], [0, 0, 1, 1], [], []>} : vector<16x64xbf16>, vector<64x64xbf16>, vector<16x64xf32> -> vector<16x64xf32>
    %5 = vector.broadcast %1 : vector<1x64xf32> to vector<16x64xf32>
    %6 = arith.addf %4, %5 : vector<16x64xf32>
    %c1 = arith.constant 1 : index
    %c0_6 = arith.constant 0 : index
    %c0_7 = arith.constant 0 : index
    %7 = vector.load %arg3[%c1, %c0_6, %c0_7] : memref<2x64x64xbf16, #tpu.memory_space<vmem>>, vector<1x64x64xbf16>
    %8 = vector.shape_cast %7 : vector<1x64x64xbf16> to vector<64x64xbf16>
    %cst_8 = arith.constant dense<0.000000e+00> : vector<16x64xf32>
    %9 = tpu.matmul %0, %8, %cst_8 {dimension_numbers = #tpu.dot_dimension_numbers<[1], [0], [0], [1], [0, 0, 1, 1], [], []>} : vector<16x64xbf16>, vector<64x64xbf16>, vector<16x64xf32> -> vector<16x64xf32>
    %10 = vector.broadcast %1 : vector<1x64xf32> to vector<16x64xf32>
    %11 = arith.addf %9, %10 : vector<16x64xf32>
    %12 = tpu.concatenate %6, %11 in 0 : vector<16x64xf32>, vector<16x64xf32> -> vector<32x64xf32>
    %13 = arith.truncf %12 : vector<32x64xf32> to vector<32x64xbf16>
    %c0_9 = arith.constant 0 : index
    %c0_10 = arith.constant 0 : index
    %14 = vector.load %arg2[%c0_9, %c0_10] : memref<32x64xbf16, #tpu.memory_space<vmem>>, vector<32x64xbf16>
    %c0_11 = arith.constant 0 : index
    %c0_12 = arith.constant 0 : index
    %c0_13 = arith.constant 0 : index
    %15 = vector.load %arg5[%c0_11, %c0_12, %c0_13] : memref<3x64x64xbf16, #tpu.memory_space<vmem>>, vector<1x64x64xbf16>
    %16 = vector.shape_cast %15 : vector<1x64x64xbf16> to vector<64x64xbf16>
    %cst_14 = arith.constant dense<0.000000e+00> : vector<32x64xf32>
    %17 = tpu.matmul %14, %16, %cst_14 {dimension_numbers = #tpu.dot_dimension_numbers<[1], [0], [0], [1], [0, 0, 1, 1], [], []>} : vector<32x64xbf16>, vector<64x64xbf16>, vector<32x64xf32> -> vector<32x64xf32>
    %c0_15 = arith.constant 0 : index
    %c0_16 = arith.constant 0 : index
    %c0_17 = arith.constant 0 : index
    %18 = vector.load %arg6[%c0_15, %c0_16, %c0_17] : memref<3x64x64xbf16, #tpu.memory_space<vmem>>, vector<1x64x64xbf16>
    %19 = vector.shape_cast %18 : vector<1x64x64xbf16> to vector<64x64xbf16>
    %cst_18 = arith.constant dense<0.000000e+00> : vector<32x64xf32>
    %20 = tpu.matmul %13, %19, %cst_18 {dimension_numbers = #tpu.dot_dimension_numbers<[1], [0], [0], [1], [0, 0, 1, 1], [], []>} : vector<32x64xbf16>, vector<64x64xbf16>, vector<32x64xf32> -> vector<32x64xf32>
    %21 = arith.addf %17, %20 : vector<32x64xf32>
    %c1_19 = arith.constant 1 : index
    %c0_20 = arith.constant 0 : index
    %c0_21 = arith.constant 0 : index
    %22 = vector.load %arg5[%c1_19, %c0_20, %c0_21] : memref<3x64x64xbf16, #tpu.memory_space<vmem>>, vector<1x64x64xbf16>
    %23 = vector.shape_cast %22 : vector<1x64x64xbf16> to vector<64x64xbf16>
    %cst_22 = arith.constant dense<0.000000e+00> : vector<32x64xf32>
    %24 = tpu.matmul %14, %23, %cst_22 {dimension_numbers = #tpu.dot_dimension_numbers<[1], [0], [0], [1], [0, 0, 1, 1], [], []>} : vector<32x64xbf16>, vector<64x64xbf16>, vector<32x64xf32> -> vector<32x64xf32>
    %c1_23 = arith.constant 1 : index
    %c0_24 = arith.constant 0 : index
    %c0_25 = arith.constant 0 : index
    %25 = vector.load %arg6[%c1_23, %c0_24, %c0_25] : memref<3x64x64xbf16, #tpu.memory_space<vmem>>, vector<1x64x64xbf16>
    %26 = vector.shape_cast %25 : vector<1x64x64xbf16> to vector<64x64xbf16>
    %cst_26 = arith.constant dense<0.000000e+00> : vector<32x64xf32>
    %27 = tpu.matmul %13, %26, %cst_26 {dimension_numbers = #tpu.dot_dimension_numbers<[1], [0], [0], [1], [0, 0, 1, 1], [], []>} : vector<32x64xbf16>, vector<64x64xbf16>, vector<32x64xf32> -> vector<32x64xf32>
    %28 = arith.addf %24, %27 : vector<32x64xf32>
    %c2 = arith.constant 2 : index
    %c0_27 = arith.constant 0 : index
    %c0_28 = arith.constant 0 : index
    %29 = vector.load %arg5[%c2, %c0_27, %c0_28] : memref<3x64x64xbf16, #tpu.memory_space<vmem>>, vector<1x64x64xbf16>
    %30 = vector.shape_cast %29 : vector<1x64x64xbf16> to vector<64x64xbf16>
    %cst_29 = arith.constant dense<0.000000e+00> : vector<32x64xf32>
    %31 = tpu.matmul %14, %30, %cst_29 {dimension_numbers = #tpu.dot_dimension_numbers<[1], [0], [0], [1], [0, 0, 1, 1], [], []>} : vector<32x64xbf16>, vector<64x64xbf16>, vector<32x64xf32> -> vector<32x64xf32>
    %c2_30 = arith.constant 2 : index
    %c0_31 = arith.constant 0 : index
    %c0_32 = arith.constant 0 : index
    %32 = vector.load %arg6[%c2_30, %c0_31, %c0_32] : memref<3x64x64xbf16, #tpu.memory_space<vmem>>, vector<1x64x64xbf16>
    %33 = vector.shape_cast %32 : vector<1x64x64xbf16> to vector<64x64xbf16>
    %cst_33 = arith.constant dense<0.000000e+00> : vector<32x64xf32>
    %34 = tpu.matmul %13, %33, %cst_33 {dimension_numbers = #tpu.dot_dimension_numbers<[1], [0], [0], [1], [0, 0, 1, 1], [], []>} : vector<32x64xbf16>, vector<64x64xbf16>, vector<32x64xf32> -> vector<32x64xf32>
    %35 = arith.addf %31, %34 : vector<32x64xf32>
    %c0_34 = arith.constant 0 : index
    %c0_35 = arith.constant 0 : index
    %36 = vector.load %arg7[%c0_34, %c0_35] : memref<1x64xf32, #tpu.memory_space<vmem>>, vector<1x64xf32>
    %37 = vector.extract_strided_slice %21 {offsets = [16, 0], sizes = [16, 64], strides = [1, 1]} : vector<32x64xf32> to vector<16x64xf32>
    %cst_36 = arith.constant 0.000000e+00 : f32
    %38 = vector.broadcast %cst_36 : f32 to vector<1x64xf32>
    %39 = vector.extract_strided_slice %37 {offsets = [0, 0], sizes = [15, 64], strides = [1, 1]} : vector<16x64xf32> to vector<15x64xf32>
    %40 = tpu.concatenate %38, %39 in 0 : vector<1x64xf32>, vector<15x64xf32> -> vector<16x64xf32>
    %41 = tpu.iota {dimensions = array<i32: 0>} : vector<16x64xi32>
    %c8_i32 = arith.constant 8 : i32
    %c0_i32 = arith.constant 0 : i32
    %42 = arith.cmpi eq, %c8_i32, %c0_i32 : i32
    %c1_i32 = arith.constant 1 : i32
    %43 = arith.select %42, %c1_i32, %c8_i32 : i32
    %44 = vector.broadcast %43 : i32 to vector<16x64xi32>
    %45 = arith.remsi %41, %44 : vector<16x64xi32>
    %c0_i32_37 = arith.constant 0 : i32
    %46 = vector.broadcast %c0_i32_37 : i32 to vector<16x64xi32>
    %47 = arith.cmpi ne, %45, %46 : vector<16x64xi32>
    %c0_i32_38 = arith.constant 0 : i32
    %48 = vector.broadcast %c0_i32_38 : i32 to vector<16x64xi32>
    %49 = arith.cmpi slt, %45, %48 : vector<16x64xi32>
    %c0_i32_39 = arith.constant 0 : i32
    %50 = arith.cmpi slt, %43, %c0_i32_39 : i32
    %51 = vector.broadcast %50 : i1 to vector<16x64xi1>
    %52 = vector.broadcast %51 : vector<16x64xi1> to vector<16x64xi1>
    %53 = arith.xori %49, %52 : vector<16x64xi1>
    %54 = arith.andi %53, %47 : vector<16x64xi1>
    %55 = vector.broadcast %43 : i32 to vector<16x64xi32>
    %56 = arith.addi %45, %55 : vector<16x64xi32>
    %57 = arith.select %54, %56, %45 : vector<16x64xi1>, vector<16x64xi32>
    %c0_i32_40 = arith.constant 0 : i32
    %58 = vector.broadcast %c0_i32_40 : i32 to vector<16x64xi32>
    %59 = arith.cmpi eq, %57, %58 : vector<16x64xi32>
    %cst_41 = arith.constant 0.000000e+00 : f32
    %60 = vector.broadcast %cst_41 : f32 to vector<16x64xf32>
    %61 = arith.select %59, %60, %40 : vector<16x64xi1>, vector<16x64xf32>
    %62 = vector.extract_strided_slice %28 {offsets = [0, 0], sizes = [16, 64], strides = [1, 1]} : vector<32x64xf32> to vector<16x64xf32>
    %63 = arith.addf %61, %62 : vector<16x64xf32>
    %64 = vector.extract_strided_slice %35 {offsets = [16, 0], sizes = [16, 64], strides = [1, 1]} : vector<32x64xf32> to vector<16x64xf32>
    %65 = arith.addf %63, %64 : vector<16x64xf32>
    %66 = vector.broadcast %36 : vector<1x64xf32> to vector<16x64xf32>
    %67 = arith.addf %65, %66 : vector<16x64xf32>
    %cst_42 = arith.constant 0.000000e+00 : f32
    %68 = vector.broadcast %cst_42 : f32 to vector<16x64xf32>
    %69 = arith.maximumf %67, %68 : vector<16x64xf32>
    %70 = vector.extract_strided_slice %21 {offsets = [0, 0], sizes = [16, 64], strides = [1, 1]} : vector<32x64xf32> to vector<16x64xf32>
    %71 = vector.extract_strided_slice %28 {offsets = [16, 0], sizes = [16, 64], strides = [1, 1]} : vector<32x64xf32> to vector<16x64xf32>
    %72 = arith.addf %70, %71 : vector<16x64xf32>
    %73 = vector.extract_strided_slice %35 {offsets = [0, 0], sizes = [16, 64], strides = [1, 1]} : vector<32x64xf32> to vector<16x64xf32>
    %74 = vector.extract_strided_slice %73 {offsets = [1, 0], sizes = [15, 64], strides = [1, 1]} : vector<16x64xf32> to vector<15x64xf32>
    %cst_43 = arith.constant 0.000000e+00 : f32
    %75 = vector.broadcast %cst_43 : f32 to vector<1x64xf32>
    %76 = tpu.concatenate %74, %75 in 0 : vector<15x64xf32>, vector<1x64xf32> -> vector<16x64xf32>
    %77 = tpu.iota {dimensions = array<i32: 0>} : vector<16x64xi32>
    %c8_i32_44 = arith.constant 8 : i32
    %c0_i32_45 = arith.constant 0 : i32
    %78 = arith.cmpi eq, %c8_i32_44, %c0_i32_45 : i32
    %c1_i32_46 = arith.constant 1 : i32
    %79 = arith.select %78, %c1_i32_46, %c8_i32_44 : i32
    %80 = vector.broadcast %79 : i32 to vector<16x64xi32>
    %81 = arith.remsi %77, %80 : vector<16x64xi32>
    %c0_i32_47 = arith.constant 0 : i32
    %82 = vector.broadcast %c0_i32_47 : i32 to vector<16x64xi32>
    %83 = arith.cmpi ne, %81, %82 : vector<16x64xi32>
    %c0_i32_48 = arith.constant 0 : i32
    %84 = vector.broadcast %c0_i32_48 : i32 to vector<16x64xi32>
    %85 = arith.cmpi slt, %81, %84 : vector<16x64xi32>
    %c0_i32_49 = arith.constant 0 : i32
    %86 = arith.cmpi slt, %79, %c0_i32_49 : i32
    %87 = vector.broadcast %86 : i1 to vector<16x64xi1>
    %88 = vector.broadcast %87 : vector<16x64xi1> to vector<16x64xi1>
    %89 = arith.xori %85, %88 : vector<16x64xi1>
    %90 = arith.andi %89, %83 : vector<16x64xi1>
    %91 = vector.broadcast %79 : i32 to vector<16x64xi32>
    %92 = arith.addi %81, %91 : vector<16x64xi32>
    %93 = arith.select %90, %92, %81 : vector<16x64xi1>, vector<16x64xi32>
    %c7_i32 = arith.constant 7 : i32
    %94 = vector.broadcast %c7_i32 : i32 to vector<16x64xi32>
    %95 = arith.cmpi eq, %93, %94 : vector<16x64xi32>
    %cst_50 = arith.constant 0.000000e+00 : f32
    %96 = vector.broadcast %cst_50 : f32 to vector<16x64xf32>
    %97 = arith.select %95, %96, %76 : vector<16x64xi1>, vector<16x64xf32>
    %98 = arith.addf %72, %97 : vector<16x64xf32>
    %99 = vector.broadcast %36 : vector<1x64xf32> to vector<16x64xf32>
    %100 = arith.addf %98, %99 : vector<16x64xf32>
    %cst_51 = arith.constant 0.000000e+00 : f32
    %101 = vector.broadcast %cst_51 : f32 to vector<16x64xf32>
    %102 = arith.maximumf %100, %101 : vector<16x64xf32>
    %103 = tpu.concatenate %69, %102 in 0 : vector<16x64xf32>, vector<16x64xf32> -> vector<32x64xf32>
    %104 = arith.truncf %103 : vector<32x64xf32> to vector<32x64xbf16>
    %c0_52 = arith.constant 0 : index
    %c0_53 = arith.constant 0 : index
    %c0_54 = arith.constant 0 : index
    %105 = vector.load %arg8[%c0_52, %c0_53, %c0_54] : memref<3x64x64xbf16, #tpu.memory_space<vmem>>, vector<1x64x64xbf16>
    %106 = vector.shape_cast %105 : vector<1x64x64xbf16> to vector<64x64xbf16>
    %cst_55 = arith.constant dense<0.000000e+00> : vector<32x64xf32>
    %107 = tpu.matmul %104, %106, %cst_55 {dimension_numbers = #tpu.dot_dimension_numbers<[1], [0], [0], [1], [0, 0, 1, 1], [], []>} : vector<32x64xbf16>, vector<64x64xbf16>, vector<32x64xf32> -> vector<32x64xf32>
    %c1_56 = arith.constant 1 : index
    %c0_57 = arith.constant 0 : index
    %c0_58 = arith.constant 0 : index
    %108 = vector.load %arg8[%c1_56, %c0_57, %c0_58] : memref<3x64x64xbf16, #tpu.memory_space<vmem>>, vector<1x64x64xbf16>
    %109 = vector.shape_cast %108 : vector<1x64x64xbf16> to vector<64x64xbf16>
    %cst_59 = arith.constant dense<0.000000e+00> : vector<32x64xf32>
    %110 = tpu.matmul %104, %109, %cst_59 {dimension_numbers = #tpu.dot_dimension_numbers<[1], [0], [0], [1], [0, 0, 1, 1], [], []>} : vector<32x64xbf16>, vector<64x64xbf16>, vector<32x64xf32> -> vector<32x64xf32>
    %c2_60 = arith.constant 2 : index
    %c0_61 = arith.constant 0 : index
    %c0_62 = arith.constant 0 : index
    %111 = vector.load %arg8[%c2_60, %c0_61, %c0_62] : memref<3x64x64xbf16, #tpu.memory_space<vmem>>, vector<1x64x64xbf16>
    %112 = vector.shape_cast %111 : vector<1x64x64xbf16> to vector<64x64xbf16>
    %cst_63 = arith.constant dense<0.000000e+00> : vector<32x64xf32>
    %113 = tpu.matmul %104, %112, %cst_63 {dimension_numbers = #tpu.dot_dimension_numbers<[1], [0], [0], [1], [0, 0, 1, 1], [], []>} : vector<32x64xbf16>, vector<64x64xbf16>, vector<32x64xf32> -> vector<32x64xf32>
    %114 = vector.extract_strided_slice %107 {offsets = [16, 0], sizes = [16, 64], strides = [1, 1]} : vector<32x64xf32> to vector<16x64xf32>
    %cst_64 = arith.constant 0.000000e+00 : f32
    %115 = vector.broadcast %cst_64 : f32 to vector<1x64xf32>
    %116 = vector.extract_strided_slice %114 {offsets = [0, 0], sizes = [15, 64], strides = [1, 1]} : vector<16x64xf32> to vector<15x64xf32>
    %117 = tpu.concatenate %115, %116 in 0 : vector<1x64xf32>, vector<15x64xf32> -> vector<16x64xf32>
    %118 = tpu.iota {dimensions = array<i32: 0>} : vector<16x64xi32>
    %c8_i32_65 = arith.constant 8 : i32
    %c0_i32_66 = arith.constant 0 : i32
    %119 = arith.cmpi eq, %c8_i32_65, %c0_i32_66 : i32
    %c1_i32_67 = arith.constant 1 : i32
    %120 = arith.select %119, %c1_i32_67, %c8_i32_65 : i32
    %121 = vector.broadcast %120 : i32 to vector<16x64xi32>
    %122 = arith.remsi %118, %121 : vector<16x64xi32>
    %c0_i32_68 = arith.constant 0 : i32
    %123 = vector.broadcast %c0_i32_68 : i32 to vector<16x64xi32>
    %124 = arith.cmpi ne, %122, %123 : vector<16x64xi32>
    %c0_i32_69 = arith.constant 0 : i32
    %125 = vector.broadcast %c0_i32_69 : i32 to vector<16x64xi32>
    %126 = arith.cmpi slt, %122, %125 : vector<16x64xi32>
    %c0_i32_70 = arith.constant 0 : i32
    %127 = arith.cmpi slt, %120, %c0_i32_70 : i32
    %128 = vector.broadcast %127 : i1 to vector<16x64xi1>
    %129 = vector.broadcast %128 : vector<16x64xi1> to vector<16x64xi1>
    %130 = arith.xori %126, %129 : vector<16x64xi1>
    %131 = arith.andi %130, %124 : vector<16x64xi1>
    %132 = vector.broadcast %120 : i32 to vector<16x64xi32>
    %133 = arith.addi %122, %132 : vector<16x64xi32>
    %134 = arith.select %131, %133, %122 : vector<16x64xi1>, vector<16x64xi32>
    %c0_i32_71 = arith.constant 0 : i32
    %135 = vector.broadcast %c0_i32_71 : i32 to vector<16x64xi32>
    %136 = arith.cmpi eq, %134, %135 : vector<16x64xi32>
    %cst_72 = arith.constant 0.000000e+00 : f32
    %137 = vector.broadcast %cst_72 : f32 to vector<16x64xf32>
    %138 = arith.select %136, %137, %117 : vector<16x64xi1>, vector<16x64xf32>
    %139 = vector.extract_strided_slice %110 {offsets = [0, 0], sizes = [16, 64], strides = [1, 1]} : vector<32x64xf32> to vector<16x64xf32>
    %140 = arith.addf %138, %139 : vector<16x64xf32>
    %141 = vector.extract_strided_slice %113 {offsets = [16, 0], sizes = [16, 64], strides = [1, 1]} : vector<32x64xf32> to vector<16x64xf32>
    %142 = arith.addf %140, %141 : vector<16x64xf32>
    %143 = vector.extract_strided_slice %107 {offsets = [0, 0], sizes = [16, 64], strides = [1, 1]} : vector<32x64xf32> to vector<16x64xf32>
    %144 = vector.extract_strided_slice %110 {offsets = [16, 0], sizes = [16, 64], strides = [1, 1]} : vector<32x64xf32> to vector<16x64xf32>
    %145 = arith.addf %143, %144 : vector<16x64xf32>
    %146 = vector.extract_strided_slice %113 {offsets = [0, 0], sizes = [16, 64], strides = [1, 1]} : vector<32x64xf32> to vector<16x64xf32>
    %147 = vector.extract_strided_slice %146 {offsets = [1, 0], sizes = [15, 64], strides = [1, 1]} : vector<16x64xf32> to vector<15x64xf32>
    %cst_73 = arith.constant 0.000000e+00 : f32
    %148 = vector.broadcast %cst_73 : f32 to vector<1x64xf32>
    %149 = tpu.concatenate %147, %148 in 0 : vector<15x64xf32>, vector<1x64xf32> -> vector<16x64xf32>
    %150 = tpu.iota {dimensions = array<i32: 0>} : vector<16x64xi32>
    %c8_i32_74 = arith.constant 8 : i32
    %c0_i32_75 = arith.constant 0 : i32
    %151 = arith.cmpi eq, %c8_i32_74, %c0_i32_75 : i32
    %c1_i32_76 = arith.constant 1 : i32
    %152 = arith.select %151, %c1_i32_76, %c8_i32_74 : i32
    %153 = vector.broadcast %152 : i32 to vector<16x64xi32>
    %154 = arith.remsi %150, %153 : vector<16x64xi32>
    %c0_i32_77 = arith.constant 0 : i32
    %155 = vector.broadcast %c0_i32_77 : i32 to vector<16x64xi32>
    %156 = arith.cmpi ne, %154, %155 : vector<16x64xi32>
    %c0_i32_78 = arith.constant 0 : i32
    %157 = vector.broadcast %c0_i32_78 : i32 to vector<16x64xi32>
    %158 = arith.cmpi slt, %154, %157 : vector<16x64xi32>
    %c0_i32_79 = arith.constant 0 : i32
    %159 = arith.cmpi slt, %152, %c0_i32_79 : i32
    %160 = vector.broadcast %159 : i1 to vector<16x64xi1>
    %161 = vector.broadcast %160 : vector<16x64xi1> to vector<16x64xi1>
    %162 = arith.xori %158, %161 : vector<16x64xi1>
    %163 = arith.andi %162, %156 : vector<16x64xi1>
    %164 = vector.broadcast %152 : i32 to vector<16x64xi32>
    %165 = arith.addi %154, %164 : vector<16x64xi32>
    %166 = arith.select %163, %165, %154 : vector<16x64xi1>, vector<16x64xi32>
    %c7_i32_80 = arith.constant 7 : i32
    %167 = vector.broadcast %c7_i32_80 : i32 to vector<16x64xi32>
    %168 = arith.cmpi eq, %166, %167 : vector<16x64xi32>
    %cst_81 = arith.constant 0.000000e+00 : f32
    %169 = vector.broadcast %cst_81 : f32 to vector<16x64xf32>
    %170 = arith.select %168, %169, %149 : vector<16x64xi1>, vector<16x64xf32>
    %171 = arith.addf %145, %170 : vector<16x64xf32>
    %172 = tpu.concatenate %142, %171 in 1 : vector<16x64xf32>, vector<16x64xf32> -> vector<16x128xf32>
    %c0_82 = arith.constant 0 : index
    %c0_83 = arith.constant 0 : index
    %173 = vector.load %arg9[%c0_82, %c0_83] : memref<1x128xf32, #tpu.memory_space<vmem>>, vector<1x128xf32>
    %174 = vector.broadcast %173 : vector<1x128xf32> to vector<16x128xf32>
    %175 = arith.mulf %172, %174 : vector<16x128xf32>
    %c0_84 = arith.constant 0 : index
    %c0_85 = arith.constant 0 : index
    %176 = vector.load %arg10[%c0_84, %c0_85] : memref<1x128xf32, #tpu.memory_space<vmem>>, vector<1x128xf32>
    %177 = vector.broadcast %176 : vector<1x128xf32> to vector<16x128xf32>
    %178 = arith.addf %175, %177 : vector<16x128xf32>
    %cst_86 = arith.constant 0.000000e+00 : f32
    %179 = vector.broadcast %cst_86 : f32 to vector<16x128xf32>
    %180 = arith.maximumf %178, %179 : vector<16x128xf32>
    %c0_87 = arith.constant 0 : index
    %c0_88 = arith.constant 0 : index
    %181 = vector.load %arg11[%c0_87, %c0_88] : memref<16x128xf32, #tpu.memory_space<vmem>>, vector<16x128xf32>
    tpu.vector_store %arg11[%c0_87, %c0_88], %180 {strides = array<i32>} : memref<16x128xf32, #tpu.memory_space<vmem>>, vector<16x128xf32>,
    return
  }
  func.func @transform_0(%arg0: i32) -> (i32, i32) {
    %c0_i32 = arith.constant 0 : i32
    %c0_i32_0 = arith.constant 0 : i32
    return %arg0, %c0_i32 : i32, i32
  }
  func.func @transform_1(%arg0: i32) -> (i32, i32) {
    %c0_i32 = arith.constant 0 : i32
    %c0_i32_0 = arith.constant 0 : i32
    return %arg0, %c0_i32 : i32, i32
  }
  func.func @transform_2(%arg0: i32) -> (i32, i32, i32) {
    %c0_i32 = arith.constant 0 : i32
    %c0_i32_0 = arith.constant 0 : i32
    %c0_i32_1 = arith.constant 0 : i32
    %c0_i32_2 = arith.constant 0 : i32
    return %c0_i32, %c0_i32_0, %c0_i32_1 : i32, i32, i32
  }
  func.func @transform_3(%arg0: i32) -> (i32, i32) {
    %c0_i32 = arith.constant 0 : i32
    %c0_i32_0 = arith.constant 0 : i32
    %c0_i32_1 = arith.constant 0 : i32
    return %c0_i32, %c0_i32_0 : i32, i32
  }
  func.func @transform_4(%arg0: i32) -> (i32, i32, i32) {
    %c0_i32 = arith.constant 0 : i32
    %c0_i32_0 = arith.constant 0 : i32
    %c0_i32_1 = arith.constant 0 : i32
    %c0_i32_2 = arith.constant 0 : i32
    return %c0_i32, %c0_i32_0, %c0_i32_1 : i32, i32, i32
  }
  func.func @transform_5(%arg0: i32) -> (i32, i32, i32) {
    %c0_i32 = arith.constant 0 : i32
    %c0_i32_0 = arith.constant 0 : i32
    %c0_i32_1 = arith.constant 0 : i32
    %c0_i32_2 = arith.constant 0 : i32
    return %c0_i32, %c0_i32_0, %c0_i32_1 : i32, i32, i32
  }
  func.func @transform_6(%arg0: i32) -> (i32, i32) {
    %c0_i32 = arith.constant 0 : i32
    %c0_i32_0 = arith.constant 0 : i32
    %c0_i32_1 = arith.constant 0 : i32
    return %c0_i32, %c0_i32_0 : i32, i32
  }
  func.func @transform_7(%arg0: i32) -> (i32, i32, i32) {
    %c0_i32 = arith.constant 0 : i32
    %c0_i32_0 = arith.constant 0 : i32
    %c0_i32_1 = arith.constant 0 : i32
    %c0_i32_2 = arith.constant 0 : i32
    return %c0_i32, %c0_i32_0, %c0_i32_1 : i32, i32, i32
  }
  func.func @transform_8(%arg0: i32) -> (i32, i32) {
    %c0_i32 = arith.constant 0 : i32
    %c0_i32_0 = arith.constant 0 : i32
    %c0_i32_1 = arith.constant 0 : i32
    return %c0_i32, %c0_i32_0 : i32, i32
  }
  func.func @transform_9(%arg0: i32) -> (i32, i32) {
    %c0_i32 = arith.constant 0 : i32
    %c0_i32_0 = arith.constant 0 : i32
    %c0_i32_1 = arith.constant 0 : i32
    return %c0_i32, %c0_i32_0 : i32, i32
  }
  func.func @transform_10(%arg0: i32) -> (i32, i32) {
    %c0_i32 = arith.constant 0 : i32
    %c0_i32_0 = arith.constant 0 : i32
    return %arg0, %c0_i32 : i32, i32
  }
}

</mosaic_0001>

<llo_original>
// kernel: tile.28
$region0: #{tile.28}
  #allocation0 [shape = 's32[1]{0}', space=sflag, size = 0x4, scoped, tag = 'scoped memory for tile.28']
  %s0 = inlined_call_operand.vmem [shape: f32[4], index: 0, kind: input, shape index: {}]
  %s1 = inlined_call_operand.vmem [shape: f32[16,4], index: 1, kind: output, shape index: {}]
  // Predicated region
  $region2: #{tile.28} parent=0 // pred_check
    _
  $region3: #{tile.28} parent=0 // pred_check_branch
    %3 = sbr.rel (0) target = $region5
  $region4: #{tile.28} parent=0 // pred_region
    _
  $region5: #{tile.28} parent=0 // pred_fallthru
    _
  %v4 = vld [vmem:[%s0] ss:$0 sm:$0xff]
  %5 = vst [vmem:[%s1] sm:$0xff] %v4
  %s6 = scalar_lea.vmem %s1, 8
  %7 = vst [vmem:[%s6] sm:$0xff] %v4

// kernel: tile.29
$region0: #{tile.29}
  %s0 = inlined_call_operand.vmem [shape: f32[16,4], index: 0, kind: input, shape index: {}]
  %s1 = inlined_call_operand.hbm [shape: f32[1,64], index: 1, kind: output, shape index: {}]
  $region1: #{tile.29} parent=0
    #allocation0 [shape = 'u8[512]{0}', space=vmem, size = 0x400, scoped, tag = 'operand span for operand 1']
    #allocation1 [shape = 's32[1]{0}', space=sflag, size = 0x4, scoped, tag = 'scoped memory for tile.29']
    #allocation2 [shape = 'u8[4096]{0}', space=vmem, size = 0x1000, scoped, tag = 'scoped mem for output reshape']
    %2 = vsyncpa [#allocation1], 0
    %v3 = vld [vmem:[%s0] sm:$0x1]
    %vm4 = vcmask 31744
    %5 = vst.msk [vmem:[#allocation2] sm:$0x1] %vm4, %v3
    %s6 = scalar_lea.vmem %s0, 15
    %v7 = vld [vmem:[%s6] sm:$0x1]
    %8 = vrot.lane.b32.xlu0 %v7, 60
    %v9 = vpop.permute.xlu0 %8
    %vm10 = vcmask 523744
    %11 = vst.msk [vmem:[#allocation2] sm:$0x1] %vm10, %v9
    %s12 = scalar_lea.vmem %s0, 14
    %v13 = vld [vmem:[%s12] sm:$0x1]
    %14 = vrot.lane.b32.xlu0 %v13, 56
    %v15 = vpop.permute.xlu0 %14
    %vm16 = vcmask 490944
    %17 = vst.msk [vmem:[#allocation2] sm:$0x1] %vm16, %v15
    %s18 = scalar_lea.vmem %s0, 13
    %v19 = vld [vmem:[%s18] sm:$0x1]
    %20 = vrot.lane.b32.xlu0 %v19, 52
    %v21 = vpop.permute.xlu0 %20
    %vm22 = vcmask 458144
    %23 = vst.msk [vmem:[#allocation2] sm:$0x1] %vm22, %v21
    %s24 = scalar_lea.vmem %s0, 12
    %v25 = vld [vmem:[%s24] sm:$0x1]
    %26 = vrot.lane.b32.xlu0 %v25, 48
    %v27 = vpop.permute.xlu0 %26
    %vm28 = vcmask 425344
    %29 = vst.msk [vmem:[#allocation2] sm:$0x1] %vm28, %v27
    %s30 = scalar_lea.vmem %s0, 11
    %v31 = vld [vmem:[%s30] sm:$0x1]
    %32 = vrot.lane.b32.xlu0 %v31, 44
    %v33 = vpop.permute.xlu0 %32
    %vm34 = vcmask 392544
    %35 = vst.msk [vmem:[#allocation2] sm:$0x1] %vm34, %v33
    %s36 = scalar_lea.vmem %s0, 10
    %v37 = vld [vmem:[%s36] sm:$0x1]
    %38 = vrot.lane.b32.xlu0 %v37, 40
    %v39 = vpop.permute.xlu0 %38
    %vm40 = vcmask 359744
    %41 = vst.msk [vmem:[#allocation2] sm:$0x1] %vm40, %v39
    %s42 = scalar_lea.vmem %s0, 9
    %v43 = vld [vmem:[%s42] sm:$0x1]
    %44 = vrot.lane.b32.xlu0 %v43, 36
    %v45 = vpop.permute.xlu0 %44
    %vm46 = vcmask 326944
    %47 = vst.msk [vmem:[#allocation2] sm:$0x1] %vm46, %v45
    %s48 = scalar_lea.vmem %s0, 8
    %v49 = vld [vmem:[%s48] sm:$0x1]
    %50 = vrot.lane.b32.xlu0 %v49, 32
    %v51 = vpop.permute.xlu0 %50
    %vm52 = vcmask 294144
    %53 = vst.msk [vmem:[#allocation2] sm:$0x1] %vm52, %v51
    %s54 = scalar_lea.vmem %s0, 7
    %v55 = vld [vmem:[%s54] sm:$0x1]
    %56 = vrot.lane.b32.xlu0 %v55, 28
    %v57 = vpop.permute.xlu0 %56
    %vm58 = vcmask 261344
    %59 = vst.msk [vmem:[#allocation2] sm:$0x1] %vm58, %v57
    %s60 = scalar_lea.vmem %s0, 6
    %v61 = vld [vmem:[%s60] sm:$0x1]
    %62 = vrot.lane.b32.xlu0 %v61, 24
    %v63 = vpop.permute.xlu0 %62
    %vm64 = vcmask 228544
    %65 = vst.msk [vmem:[#allocation2] sm:$0x1] %vm64, %v63
    %s66 = scalar_lea.vmem %s0, 5
    %v67 = vld [vmem:[%s66] sm:$0x1]
    %68 = vrot.lane.b32.xlu0 %v67, 20
    %v69 = vpop.permute.xlu0 %68
    %vm70 = vcmask 195744
    %71 = vst.msk [vmem:[#allocation2] sm:$0x1] %vm70, %v69
    %s72 = scalar_lea.vmem %s0, 4
    %v73 = vld [vmem:[%s72] sm:$0x1]
    %74 = vrot.lane.b32.xlu0 %v73, 16
    %v75 = vpop.permute.xlu0 %74
    %vm76 = vcmask 162944
    %77 = vst.msk [vmem:[#allocation2] sm:$0x1] %vm76, %v75
    %s78 = scalar_lea.vmem %s0, 3
    %v79 = vld [vmem:[%s78] sm:$0x1]
    %80 = vrot.lane.b32.xlu0 %v79, 12
    %v81 = vpop.permute.xlu0 %80
    %vm82 = vcmask 130144
    %83 = vst.msk [vmem:[#allocation2] sm:$0x1] %vm82, %v81
    %s84 = scalar_lea.vmem %s0, 2
    %v85 = vld [vmem:[%s84] sm:$0x1]
    %86 = vrot.lane.b32.xlu0 %v85, 8
    %v87 = vpop.permute.xlu0 %86
    %vm88 = vcmask 97344
    %89 = vst.msk [vmem:[#allocation2] sm:$0x1] %vm88, %v87
    %s90 = scalar_lea.vmem %s0, 1
    %v91 = vld [vmem:[%s90] sm:$0x1]
    %92 = vrot.lane.b32.xlu0 %v91, 4
    %v93 = vpop.permute.xlu0 %92
    %vm94 = vcmask 64544
    %95 = vst.msk [vmem:[#allocation2] sm:$0x1] %vm94, %v93
    %s97 = sshllo.u32 0, 1
    %v99 = vld [vmem:[#allocation2] sm:%s97]
    %s100 = sshllo.u32 0, 1
    %101 = vst [vmem:[#allocation0] sm:%s100] %v99
    %s103 = ssub.s32 16, 16
    %104 = vsyncadd [#allocation1], %s103
    %s106 = sshll.u32 [#allocation0], 4
    %s107 = int_to_ptr.vmem [resolvable:$true] %s106
    %109 = dma.vmem_to_hbm [thread:$0]  %s107, 16, %s1, [#allocation1]
    %110 = dma.done [#allocation1], 16
    %111 = vsyncpa [#allocation1], 1

// kernel: tile.38
$region0: #{tile.38}
  #allocation0 [shape = 's32[1]{0}', space=sflag, size = 0x4, scoped, tag = 'scoped memory for tile.38']
  %s0 = inlined_call_operand.vmem [shape: f32[4], index: 0, kind: input, shape index: {}]
  %s1 = inlined_call_operand.vmem [shape: f32[32,4], index: 1, kind: output, shape index: {}]
  // Predicated region
  $region2: #{tile.38} parent=0 // pred_check
    _
  $region3: #{tile.38} parent=0 // pred_check_branch
    %3 = sbr.rel (0) target = $region5
  $region4: #{tile.38} parent=0 // pred_region
    _
  $region5: #{tile.38} parent=0 // pred_fallthru
    _
  %v4 = vld [vmem:[%s0] ss:$0 sm:$0xff]
  %5 = vst [vmem:[%s1] sm:$0xff] %v4
  %s6 = scalar_lea.vmem %s1, 8
  %7 = vst [vmem:[%s6] sm:$0xff] %v4
  %s8 = scalar_lea.vmem %s1, 16
  %9 = vst [vmem:[%s8] sm:$0xff] %v4
  %s10 = scalar_lea.vmem %s1, 24
  %11 = vst [vmem:[%s10] sm:$0xff] %v4

// kernel: tile.39
$region0: #{tile.39}
  %s0 = inlined_call_operand.vmem [shape: f32[32,4], index: 0, kind: input, shape index: {}]
  %s1 = inlined_call_operand.hbm [shape: f32[1,128], index: 1, kind: output, shape index: {}]
  $region1: #{tile.39} parent=0
    #allocation0 [shape = 'u8[512]{0}', space=vmem, size = 0x400, scoped, tag = 'operand span for operand 1']
    #allocation1 [shape = 's32[1]{0}', space=sflag, size = 0x4, scoped, tag = 'scoped memory for tile.39']
    #allocation2 [shape = 'u8[4096]{0}', space=vmem, size = 0x1000, scoped, tag = 'scoped mem for output reshape']
    %2 = vsyncpa [#allocation1], 0
    %v3 = vld [vmem:[%s0] sm:$0x1]
    %vm4 = vcmask 31744
    %5 = vst.msk [vmem:[#allocation2] sm:$0x1] %vm4, %v3
    %s6 = scalar_lea.vmem %s0, 31
    %v7 = vld [vmem:[%s6] sm:$0x1]
    %8 = vrot.lane.b32.xlu0 %v7, 124
    %v9 = vpop.permute.xlu0 %8
    %vm10 = vcmask 1048544
    %11 = vst.msk [vmem:[#allocation2] sm:$0x1] %vm10, %v9
    %s12 = scalar_lea.vmem %s0, 30
    %v13 = vld [vmem:[%s12] sm:$0x1]
    %14 = vrot.lane.b32.xlu0 %v13, 120
    %v15 = vpop.permute.xlu0 %14
    %vm16 = vcmask 1015744
    %17 = vst.msk [vmem:[#allocation2] sm:$0x1] %vm16, %v15
    %s18 = scalar_lea.vmem %s0, 29
    %v19 = vld [vmem:[%s18] sm:$0x1]
    %20 = vrot.lane.b32.xlu0 %v19, 116
    %v21 = vpop.permute.xlu0 %20
    %vm22 = vcmask 982944
    %23 = vst.msk [vmem:[#allocation2] sm:$0x1] %vm22, %v21
    %s24 = scalar_lea.vmem %s0, 28
    %v25 = vld [vmem:[%s24] sm:$0x1]
    %26 = vrot.lane.b32.xlu0 %v25, 112
    %v27 = vpop.permute.xlu0 %26
    %vm28 = vcmask 950144
    %29 = vst.msk [vmem:[#allocation2] sm:$0x1] %vm28, %v27
    %s30 = scalar_lea.vmem %s0, 27
    %v31 = vld [vmem:[%s30] sm:$0x1]
    %32 = vrot.lane.b32.xlu0 %v31, 108
    %v33 = vpop.permute.xlu0 %32
    %vm34 = vcmask 917344
    %35 = vst.msk [vmem:[#allocation2] sm:$0x1] %vm34, %v33
    %s36 = scalar_lea.vmem %s0, 26
    %v37 = vld [vmem:[%s36] sm:$0x1]
    %38 = vrot.lane.b32.xlu0 %v37, 104
    %v39 = vpop.permute.xlu0 %38
    %vm40 = vcmask 884544
    %41 = vst.msk [vmem:[#allocation2] sm:$0x1] %vm40, %v39
    %s42 = scalar_lea.vmem %s0, 25
    %v43 = vld [vmem:[%s42] sm:$0x1]
    %44 = vrot.lane.b32.xlu0 %v43, 100
    %v45 = vpop.permute.xlu0 %44
    %vm46 = vcmask 851744
    %47 = vst.msk [vmem:[#allocation2] sm:$0x1] %vm46, %v45
    %s48 = scalar_lea.vmem %s0, 24
    %v49 = vld [vmem:[%s48] sm:$0x1]
    %50 = vrot.lane.b32.xlu0 %v49, 96
    %v51 = vpop.permute.xlu0 %50
    %vm52 = vcmask 818944
    %53 = vst.msk [vmem:[#allocation2] sm:$0x1] %vm52, %v51
    %s54 = scalar_lea.vmem %s0, 23
    %v55 = vld [vmem:[%s54] sm:$0x1]
    %56 = vrot.lane.b32.xlu0 %v55, 92
    %v57 = vpop.permute.xlu0 %56
    %vm58 = vcmask 786144
    %59 = vst.msk [vmem:[#allocation2] sm:$0x1] %vm58, %v57
    %s60 = scalar_lea.vmem %s0, 22
    %v61 = vld [vmem:[%s60] sm:$0x1]
    %62 = vrot.lane.b32.xlu0 %v61, 88
    %v63 = vpop.permute.xlu0 %62
    %vm64 = vcmask 753344
    %65 = vst.msk [vmem:[#allocation2] sm:$0x1] %vm64, %v63
    %s66 = scalar_lea.vmem %s0, 21
    %v67 = vld [vmem:[%s66] sm:$0x1]
    %68 = vrot.lane.b32.xlu0 %v67, 84
    %v69 = vpop.permute.xlu0 %68
    %vm70 = vcmask 720544
    %71 = vst.msk [vmem:[#allocation2] sm:$0x1] %vm70, %v69
    %s72 = scalar_lea.vmem %s0, 20
    %v73 = vld [vmem:[%s72] sm:$0x1]
    %74 = vrot.lane.b32.xlu0 %v73, 80
    %v75 = vpop.permute.xlu0 %74
    %vm76 = vcmask 687744
    %77 = vst.msk [vmem:[#allocation2] sm:$0x1] %vm76, %v75
    %s78 = scalar_lea.vmem %s0, 19
    %v79 = vld [vmem:[%s78] sm:$0x1]
    %80 = vrot.lane.b32.xlu0 %v79, 76
    %v81 = vpop.permute.xlu0 %80
    %vm82 = vcmask 654944
    %83 = vst.msk [vmem:[#allocation2] sm:$0x1] %vm82, %v81
    %s84 = scalar_lea.vmem %s0, 18
    %v85 = vld [vmem:[%s84] sm:$0x1]
    %86 = vrot.lane.b32.xlu0 %v85, 72
    %v87 = vpop.permute.xlu0 %86
    %vm88 = vcmask 622144
    %89 = vst.msk [vmem:[#allocation2] sm:$0x1] %vm88, %v87
    %s90 = scalar_lea.vmem %s0, 17
    %v91 = vld [vmem:[%s90] sm:$0x1]
    %92 = vrot.lane.b32.xlu0 %v91, 68
    %v93 = vpop.permute.xlu0 %92
    %vm94 = vcmask 589344
    %95 = vst.msk [vmem:[#allocation2] sm:$0x1] %vm94, %v93
    %s96 = scalar_lea.vmem %s0, 16
    %v97 = vld [vmem:[%s96] sm:$0x1]
    %98 = vrot.lane.b32.xlu0 %v97, 64
    %v99 = vpop.permute.xlu0 %98
    %vm100 = vcmask 556544
    %101 = vst.msk [vmem:[#allocation2] sm:$0x1] %vm100, %v99
    %s102 = scalar_lea.vmem %s0, 15
    %v103 = vld [vmem:[%s102] sm:$0x1]
    %104 = vrot.lane.b32.xlu0 %v103, 60
    %v105 = vpop.permute.xlu0 %104
    %vm106 = vcmask 523744
    %107 = vst.msk [vmem:[#allocation2] sm:$0x1] %vm106, %v105
    %s108 = scalar_lea.vmem %s0, 14
    %v109 = vld [vmem:[%s108] sm:$0x1]
    %110 = vrot.lane.b32.xlu0 %v109, 56
    %v111 = vpop.permute.xlu0 %110
    %vm112 = vcmask 490944
    %113 = vst.msk [vmem:[#allocation2] sm:$0x1] %vm112, %v111
    %s114 = scalar_lea.vmem %s0, 13
    %v115 = vld [vmem:[%s114] sm:$0x1]
    %116 = vrot.lane.b32.xlu0 %v115, 52
    %v117 = vpop.permute.xlu0 %116
    %vm118 = vcmask 458144
    %119 = vst.msk [vmem:[#allocation2] sm:$0x1] %vm118, %v117
    %s120 = scalar_lea.vmem %s0, 12
    %v121 = vld [vmem:[%s120] sm:$0x1]
    %122 = vrot.lane.b32.xlu0 %v121, 48
    %v123 = vpop.permute.xlu0 %122
    %vm124 = vcmask 425344
    %125 = vst.msk [vmem:[#allocation2] sm:$0x1] %vm124, %v123
    %s126 = scalar_lea.vmem %s0, 11
    %v127 = vld [vmem:[%s126] sm:$0x1]
    %128 = vrot.lane.b32.xlu0 %v127, 44
    %v129 = vpop.permute.xlu0 %128
    %vm130 = vcmask 392544
    %131 = vst.msk [vmem:[#allocation2] sm:$0x1] %vm130, %v129
    %s132 = scalar_lea.vmem %s0, 10
    %v133 = vld [vmem:[%s132] sm:$0x1]
    %134 = vrot.lane.b32.xlu0 %v133, 40
    %v135 = vpop.permute.xlu0 %134
    %vm136 = vcmask 359744
    %137 = vst.msk [vmem:[#allocation2] sm:$0x1] %vm136, %v135
    %s138 = scalar_lea.vmem %s0, 9
    %v139 = vld [vmem:[%s138] sm:$0x1]
    %140 = vrot.lane.b32.xlu0 %v139, 36
    %v141 = vpop.permute.xlu0 %140
    %vm142 = vcmask 326944
    %143 = vst.msk [vmem:[#allocation2] sm:$0x1] %vm142, %v141
    %s144 = scalar_lea.vmem %s0, 8
    %v145 = vld [vmem:[%s144] sm:$0x1]
    %146 = vrot.lane.b32.xlu0 %v145, 32
    %v147 = vpop.permute.xlu0 %146
    %vm148 = vcmask 294144
    %149 = vst.msk [vmem:[#allocation2] sm:$0x1] %vm148, %v147
    %s150 = scalar_lea.vmem %s0, 7
    %v151 = vld [vmem:[%s150] sm:$0x1]
    %152 = vrot.lane.b32.xlu0 %v151, 28
    %v153 = vpop.permute.xlu0 %152
    %vm154 = vcmask 261344
    %155 = vst.msk [vmem:[#allocation2] sm:$0x1] %vm154, %v153
    %s156 = scalar_lea.vmem %s0, 6
    %v157 = vld [vmem:[%s156] sm:$0x1]
    %158 = vrot.lane.b32.xlu0 %v157, 24
    %v159 = vpop.permute.xlu0 %158
    %vm160 = vcmask 228544
    %161 = vst.msk [vmem:[#allocation2] sm:$0x1] %vm160, %v159
    %s162 = scalar_lea.vmem %s0, 5
    %v163 = vld [vmem:[%s162] sm:$0x1]
    %164 = vrot.lane.b32.xlu0 %v163, 20
    %v165 = vpop.permute.xlu0 %164
    %vm166 = vcmask 195744
    %167 = vst.msk [vmem:[#allocation2] sm:$0x1] %vm166, %v165
    %s168 = scalar_lea.vmem %s0, 4
    %v169 = vld [vmem:[%s168] sm:$0x1]
    %170 = vrot.lane.b32.xlu0 %v169, 16
    %v171 = vpop.permute.xlu0 %170
    %vm172 = vcmask 162944
    %173 = vst.msk [vmem:[#allocation2] sm:$0x1] %vm172, %v171
    %s174 = scalar_lea.vmem %s0, 3
    %v175 = vld [vmem:[%s174] sm:$0x1]
    %176 = vrot.lane.b32.xlu0 %v175, 12
    %v177 = vpop.permute.xlu0 %176
    %vm178 = vcmask 130144
    %179 = vst.msk [vmem:[#allocation2] sm:$0x1] %vm178, %v177
    %s180 = scalar_lea.vmem %s0, 2
    %v181 = vld [vmem:[%s180] sm:$0x1]
    %182 = vrot.lane.b32.xlu0 %v181, 8
    %v183 = vpop.permute.xlu0 %182
    %vm184 = vcmask 97344
    %185 = vst.msk [vmem:[#allocation2] sm:$0x1] %vm184, %v183
    %s186 = scalar_lea.vmem %s0, 1
    %v187 = vld [vmem:[%s186] sm:$0x1]
    %188 = vrot.lane.b32.xlu0 %v187, 4
    %v189 = vpop.permute.xlu0 %188
    %vm190 = vcmask 64544
    %191 = vst.msk [vmem:[#allocation2] sm:$0x1] %vm190, %v189
    %s193 = sshllo.u32 0, 1
    %v195 = vld [vmem:[#allocation2] sm:%s193]
    %s196 = sshllo.u32 0, 1
    %197 = vst [vmem:[#allocation0] sm:%s196] %v195
    %s199 = ssub.s32 16, 16
    %200 = vsyncadd [#allocation1], %s199
    %s202 = sshll.u32 [#allocation0], 4
    %s203 = int_to_ptr.vmem [resolvable:$true] %s202
    %205 = dma.vmem_to_hbm [thread:$0]  %s203, 16, %s1, [#allocation1]
    %206 = dma.done [#allocation1], 16
    %207 = vsyncpa [#allocation1], 1

// kernel: upblock_forward.1
$region0: #{upblock_forward.1}
  #allocation0 [shape = 'u32[]', space=smem, size = 0x4, offset = 0x4, fixed_abs, tag = 'smem constant byte address 0x4 - core index']
  #allocation1 [shape = 'u32[144,128]{1,0:T(1,128)}', space=vmem, size = 0x12000, scoped, tag = 'internal scratch']
  %s0 = inlined_call_operand.hbm [shape: bf16[16,64], index: 0, kind: input, shape index: {}]
  %s1 = inlined_call_operand.hbm [shape: bf16[32,64], index: 1, kind: input, shape index: {}]
  %s2 = inlined_call_operand.hbm [shape: bf16[2,64,64], index: 2, kind: input, shape index: {}]
  %s3 = inlined_call_operand.hbm [shape: f32[1,64], index: 3, kind: input, shape index: {}]
  %s4 = inlined_call_operand.hbm [shape: bf16[3,64,64], index: 4, kind: input, shape index: {}]
  %s5 = inlined_call_operand.hbm [shape: bf16[3,64,64], index: 5, kind: input, shape index: {}]
  %s6 = inlined_call_operand.hbm [shape: f32[1,64], index: 6, kind: input, shape index: {}]
  %s7 = inlined_call_operand.hbm [shape: bf16[3,64,64], index: 7, kind: input, shape index: {}]
  %s8 = inlined_call_operand.hbm [shape: f32[1,128], index: 8, kind: input, shape index: {}]
  %s9 = inlined_call_operand.hbm [shape: f32[1,128], index: 9, kind: input, shape index: {}]
  %s10 = inlined_call_operand.hbm [shape: f32[16,128], index: 10, kind: output, shape index: {}]
  %s11 = sld [smem:[#allocation0]]
  $region90: #{upblock_forward.1} parent=0
    _
  %s13 = ssub.s32 1, %s11
  %s14 = scalar_select 0, %s13, %s11
  $region1: #{upblock_forward.1} parent=0
    #allocation2 [shape = 'u8[4096]{0}', space=vmem, size = 0x1000, scoped, tag = 'input window, operand 0, single buffered']
    #allocation3 [shape = 's32[1]{0}', space=sflag, size = 0x4, scoped, tag = 'scoped memory for upblock_forward.1']
    #allocation4 [shape = 's32[1]{0}', space=sflag, size = 0x4, scoped, tag = 'scoped memory for upblock_forward.1']
    #allocation5 [shape = 'u8[8192]{0}', space=vmem, size = 0x2000, scoped, tag = 'input window, operand 1, single buffered']
    #allocation6 [shape = 's32[1]{0}', space=sflag, size = 0x4, scoped, tag = 'scoped memory for upblock_forward.1']
    #allocation7 [shape = 'u8[32768]{0}', space=vmem, size = 0x8000, scoped, tag = 'input window, operand 2, single buffered']
    #allocation8 [shape = 'u8[512]{0}', space=vmem, size = 0x400, scoped, tag = 'input window, operand 3, single buffered']
    #allocation9 [shape = 's32[1]{0}', space=sflag, size = 0x4, scoped, tag = 'scoped memory for upblock_forward.1']
    #allocation10 [shape = 'u8[49152]{0}', space=vmem, size = 0xc000, scoped, tag = 'input window, operand 4, single buffered']
    #allocation11 [shape = 'u8[49152]{0}', space=vmem, size = 0xc000, scoped, tag = 'input window, operand 5, single buffered']
    #allocation12 [shape = 's32[1]{0}', space=sflag, size = 0x4, scoped, tag = 'scoped memory for upblock_forward.1']
    #allocation13 [shape = 'u8[512]{0}', space=vmem, size = 0x400, scoped, tag = 'input window, operand 6, single buffered']
    #allocation14 [shape = 'u8[49152]{0}', space=vmem, size = 0xc000, scoped, tag = 'input window, operand 7, single buffered']
    #allocation15 [shape = 's32[1]{0}', space=sflag, size = 0x4, scoped, tag = 'scoped memory for upblock_forward.1']
    #allocation16 [shape = 'u8[512]{0}', space=vmem, size = 0x400, scoped, tag = 'input window, operand 8, single buffered']
    #allocation17 [shape = 'u8[512]{0}', space=vmem, size = 0x400, scoped, tag = 'input window, operand 9, single buffered']
    #allocation18 [shape = 's32[1]{0}', space=sflag, size = 0x4, scoped, tag = 'scoped memory for upblock_forward.1']
    #allocation19 [shape = 'u8[8192]{0}', space=vmem, size = 0x2000, scoped, tag = 'output window, operand 0, single buffered']
    %15 = vsyncpa [#allocation3], 0
    %16 = vsyncpa [#allocation6], 0
    %17 = vsyncpa [#allocation9], 0
    %18 = vsyncpa [#allocation12], 0
    %19 = vsyncpa [#allocation15], 0
    %20 = vsyncpa [#allocation18], 0
    %21 = vsyncpa [#allocation4], 0
    // Predicated region
    $region2: #{upblock_forward.1} parent=1 // pred_check
      _
    $region3: #{upblock_forward.1} parent=1 // pred_check_branch
      %23 = sbr.rel (0) target = $region5
    $region4: #{upblock_forward.1} parent=1 // pred_region
      %s25 = ssub.s32 128, 128
      %26 = vsyncadd [#allocation3], %s25
      %s27 = sshll.u32 [#allocation2], 4
      %s28 = int_to_ptr.vmem [resolvable:$true] %s27
      %33 = dma.hbm_to_vmem [thread:$0]  %s0, 128, %s28, [#allocation3], 64, 64, 4
    $region5: #{upblock_forward.1} parent=1 // pred_fallthru
      _
    // Predicated region
    $region6: #{upblock_forward.1} parent=1 // pred_check
      _
    $region7: #{upblock_forward.1} parent=1 // pred_check_branch
      %35 = sbr.rel (0) target = $region9
    $region8: #{upblock_forward.1} parent=1 // pred_region
      %s37 = ssub.s32 256, 256
      %38 = vsyncadd [#allocation6], %s37
      %s39 = sshll.u32 [#allocation5], 4
      %s40 = int_to_ptr.vmem [resolvable:$true] %s39
      %45 = dma.hbm_to_vmem [thread:$0]  %s1, 256, %s40, [#allocation6], 64, 64, 4
    $region9: #{upblock_forward.1} parent=1 // pred_fallthru
      _
    // Predicated region
    $region10: #{upblock_forward.1} parent=1 // pred_check
      _
    $region11: #{upblock_forward.1} parent=1 // pred_check_branch
      %47 = sbr.rel (0) target = $region13
    $region12: #{upblock_forward.1} parent=1 // pred_region
      %s49 = ssub.s32 1024, 1024
      %50 = vsyncadd [#allocation6], %s49
      %s51 = sshll.u32 [#allocation7], 4
      %s52 = int_to_ptr.vmem [resolvable:$true] %s51
      %57 = dma.hbm_to_vmem [thread:$0]  %s2, 1024, %s52, [#allocation6], 64, 64, 4
    $region13: #{upblock_forward.1} parent=1 // pred_fallthru
      _
    // Predicated region
    $region14: #{upblock_forward.1} parent=1 // pred_check
      _
    $region15: #{upblock_forward.1} parent=1 // pred_check_branch
      %59 = sbr.rel (0) target = $region17
    $region16: #{upblock_forward.1} parent=1 // pred_region
      %s61 = ssub.s32 16, 16
      %62 = vsyncadd [#allocation9], %s61
      %s64 = sshll.u32 [#allocation8], 4
      %s65 = int_to_ptr.vmem [resolvable:$true] %s64
      %67 = dma.hbm_to_vmem [thread:$0]  %s3, 16, %s65, [#allocation9]
    $region17: #{upblock_forward.1} parent=1 // pred_fallthru
      _
    // Predicated region
    $region18: #{upblock_forward.1} parent=1 // pred_check
      _
    $region19: #{upblock_forward.1} parent=1 // pred_check_branch
      %69 = sbr.rel (0) target = $region21
    $region20: #{upblock_forward.1} parent=1 // pred_region
      %s71 = ssub.s32 1536, 1536
      %72 = vsyncadd [#allocation9], %s71
      %s73 = sshll.u32 [#allocation10], 4
      %s74 = int_to_ptr.vmem [resolvable:$true] %s73
      %79 = dma.hbm_to_vmem [thread:$0]  %s4, 1536, %s74, [#allocation9], 64, 64, 4
    $region21: #{upblock_forward.1} parent=1 // pred_fallthru
      _
    // Predicated region
    $region22: #{upblock_forward.1} parent=1 // pred_check
      _
    $region23: #{upblock_forward.1} parent=1 // pred_check_branch
      %81 = sbr.rel (0) target = $region25
    $region24: #{upblock_forward.1} parent=1 // pred_region
      %s83 = ssub.s32 1536, 1536
      %84 = vsyncadd [#allocation12], %s83
      %s85 = sshll.u32 [#allocation11], 4
      %s86 = int_to_ptr.vmem [resolvable:$true] %s85
      %91 = dma.hbm_to_vmem [thread:$0]  %s5, 1536, %s86, [#allocation12], 64, 64, 4
    $region25: #{upblock_forward.1} parent=1 // pred_fallthru
      _
    // Predicated region
    $region26: #{upblock_forward.1} parent=1 // pred_check
      _
    $region27: #{upblock_forward.1} parent=1 // pred_check_branch
      %93 = sbr.rel (0) target = $region29
    $region28: #{upblock_forward.1} parent=1 // pred_region
      %s95 = ssub.s32 16, 16
      %96 = vsyncadd [#allocation12], %s95
      %s98 = sshll.u32 [#allocation13], 4
      %s99 = int_to_ptr.vmem [resolvable:$true] %s98
      %101 = dma.hbm_to_vmem [thread:$0]  %s6, 16, %s99, [#allocation12]
    $region29: #{upblock_forward.1} parent=1 // pred_fallthru
      _
    // Predicated region
    $region30: #{upblock_forward.1} parent=1 // pred_check
      _
    $region31: #{upblock_forward.1} parent=1 // pred_check_branch
      %103 = sbr.rel (0) target = $region33
    $region32: #{upblock_forward.1} parent=1 // pred_region
      %s105 = ssub.s32 1536, 1536
      %106 = vsyncadd [#allocation15], %s105
      %s107 = sshll.u32 [#allocation14], 4
      %s108 = int_to_ptr.vmem [resolvable:$true] %s107
      %113 = dma.hbm_to_vmem [thread:$0]  %s7, 1536, %s108, [#allocation15], 64, 64, 4
    $region33: #{upblock_forward.1} parent=1 // pred_fallthru
      _
    // Predicated region
    $region34: #{upblock_forward.1} parent=1 // pred_check
      _
    $region35: #{upblock_forward.1} parent=1 // pred_check_branch
      %115 = sbr.rel (0) target = $region37
    $region36: #{upblock_forward.1} parent=1 // pred_region
      %s117 = ssub.s32 16, 16
      %118 = vsyncadd [#allocation15], %s117
      %s120 = sshll.u32 [#allocation16], 4
      %s121 = int_to_ptr.vmem [resolvable:$true] %s120
      %123 = dma.hbm_to_vmem [thread:$0]  %s8, 16, %s121, [#allocation15]
    $region37: #{upblock_forward.1} parent=1 // pred_fallthru
      _
    // Predicated region
    $region38: #{upblock_forward.1} parent=1 // pred_check
      _
    $region39: #{upblock_forward.1} parent=1 // pred_check_branch
      %125 = sbr.rel (0) target = $region41
    $region40: #{upblock_forward.1} parent=1 // pred_region
      %s127 = ssub.s32 16, 16
      %128 = vsyncadd [#allocation18], %s127
      %s130 = sshll.u32 [#allocation17], 4
      %s131 = int_to_ptr.vmem [resolvable:$true] %s130
      %133 = dma.hbm_to_vmem [thread:$0]  %s9, 16, %s131, [#allocation18]
    $region41: #{upblock_forward.1} parent=1 // pred_fallthru
      _
    // Predicated region
    $region42: #{upblock_forward.1} parent=1 // pred_check
      _
    $region43: #{upblock_forward.1} parent=1 // pred_check_branch
      %135 = sbr.rel (0) target = $region45
    $region44: #{upblock_forward.1} parent=1 // pred_region
      %136 = dma.done [#allocation3], 128
    $region45: #{upblock_forward.1} parent=1 // pred_fallthru
      _
    // Predicated region
    $region46: #{upblock_forward.1} parent=1 // pred_check
      _
    $region47: #{upblock_forward.1} parent=1 // pred_check_branch
      %138 = sbr.rel (0) target = $region49
    $region48: #{upblock_forward.1} parent=1 // pred_region
      %139 = dma.done [#allocation6], 256
    $region49: #{upblock_forward.1} parent=1 // pred_fallthru
      _
    // Predicated region
    $region50: #{upblock_forward.1} parent=1 // pred_check
      _
    $region51: #{upblock_forward.1} parent=1 // pred_check_branch
      %141 = sbr.rel (0) target = $region53
    $region52: #{upblock_forward.1} parent=1 // pred_region
      %142 = dma.done [#allocation6], 1024
    $region53: #{upblock_forward.1} parent=1 // pred_fallthru
      _
    // Predicated region
    $region54: #{upblock_forward.1} parent=1 // pred_check
      _
    $region55: #{upblock_forward.1} parent=1 // pred_check_branch
      %144 = sbr.rel (0) target = $region57
    $region56: #{upblock_forward.1} parent=1 // pred_region
      %145 = dma.done [#allocation9], 16
    $region57: #{upblock_forward.1} parent=1 // pred_fallthru
      _
    // Predicated region
    $region58: #{upblock_forward.1} parent=1 // pred_check
      _
    $region59: #{upblock_forward.1} parent=1 // pred_check_branch
      %147 = sbr.rel (0) target = $region61
    $region60: #{upblock_forward.1} parent=1 // pred_region
      %148 = dma.done [#allocation9], 1536
    $region61: #{upblock_forward.1} parent=1 // pred_fallthru
      _
    // Predicated region
    $region62: #{upblock_forward.1} parent=1 // pred_check
      _
    $region63: #{upblock_forward.1} parent=1 // pred_check_branch
      %150 = sbr.rel (0) target = $region65
    $region64: #{upblock_forward.1} parent=1 // pred_region
      %151 = dma.done [#allocation12], 1536
    $region65: #{upblock_forward.1} parent=1 // pred_fallthru
      _
    // Predicated region
    $region66: #{upblock_forward.1} parent=1 // pred_check
      _
    $region67: #{upblock_forward.1} parent=1 // pred_check_branch
      %153 = sbr.rel (0) target = $region69
    $region68: #{upblock_forward.1} parent=1 // pred_region
      %154 = dma.done [#allocation12], 16
    $region69: #{upblock_forward.1} parent=1 // pred_fallthru
      _
    // Predicated region
    $region70: #{upblock_forward.1} parent=1 // pred_check
      _
    $region71: #{upblock_forward.1} parent=1 // pred_check_branch
      %156 = sbr.rel (0) target = $region73
    $region72: #{upblock_forward.1} parent=1 // pred_region
      %157 = dma.done [#allocation15], 1536
    $region73: #{upblock_forward.1} parent=1 // pred_fallthru
      _
    // Predicated region
    $region74: #{upblock_forward.1} parent=1 // pred_check
      _
    $region75: #{upblock_forward.1} parent=1 // pred_check_branch
      %159 = sbr.rel (0) target = $region77
    $region76: #{upblock_forward.1} parent=1 // pred_region
      %160 = dma.done [#allocation15], 16
    $region77: #{upblock_forward.1} parent=1 // pred_fallthru
      _
    // Predicated region
    $region78: #{upblock_forward.1} parent=1 // pred_check
      _
    $region79: #{upblock_forward.1} parent=1 // pred_check_branch
      %162 = sbr.rel (0) target = $region81
    $region80: #{upblock_forward.1} parent=1 // pred_region
      %163 = dma.done [#allocation18], 16
    $region81: #{upblock_forward.1} parent=1 // pred_fallthru
      _
    %v165 = vld [vmem:[#allocation2] sm:$0xf]
    %v166 = vld [vmem:[#allocation2 + $0x4] sm:$0xf]
    %v167 = vld [vmem:[#allocation8] sm:$0x1]
    %v168 = vld [vmem:[#allocation7] sm:$0xf]
    %v169 = vld [vmem:[#allocation7 + $0x4] sm:$0xf]
    %v170 = vld [vmem:[#allocation7 + $0x8] sm:$0xf]
    %v171 = vld [vmem:[#allocation7 + $0xc] sm:$0xf]
    %v172 = vld [vmem:[#allocation7 + $0x10] sm:$0xf]
    %v173 = vld [vmem:[#allocation7 + $0x14] sm:$0xf]
    %v174 = vld [vmem:[#allocation7 + $0x18] sm:$0xf]
    %v175 = vld [vmem:[#allocation7 + $0x1c] sm:$0xf]
    %v177 = vlaneseq
    %v178 = vshrl.u32 %v177, 7
    %v179 = vsub.s32 0, %v178
    %v180 = vrot.slane %v167, %v179
    %v184 = vunpack.c.l.b16 %v165
    %v185 = vunpack.c.l.b16 %v166
    %v186 = vpack.c.b16 %v185, %v184
    %v195 = vunpack.c.l.b16 %v168
    %v196 = vunpack.c.l.b16 %v169
    %v197 = vunpack.c.l.b16 %v170
    %v198 = vunpack.c.l.b16 %v171
    %v199 = vunpack.c.l.b16 %v172
    %v200 = vunpack.c.l.b16 %v173
    %v201 = vunpack.c.l.b16 %v174
    %v202 = vunpack.c.l.b16 %v175
    %v203 = vpack.c.b16 %v196, %v195
    %v204 = vpack.c.b16 %v198, %v197
    %v205 = vpack.c.b16 %v200, %v199
    %v206 = vpack.c.b16 %v202, %v201
    %vm211 = vcmask 523264
    %v213 = vsel %vm211, %v186, 0
    %215 = vmatprep.subr.bf16.mxu0 0
    %216 = vmatpush1.bf16.msra.mxu0 %v203
    %217 = vmatprep.subr.bf16.mxu0 0
    %218 = vmatpush1.bf16.msra.mxu0 %v204
    %219 = vmatprep.subr.bf16.mxu0 0
    %220 = vmatpush1.bf16.msra.mxu0 %v205
    %221 = vmatprep.subr.bf16.mxu0 0
    %222 = vmatpush1.bf16.msra.mxu0 %v206
    %223 = vmatprep.subr.bf16.mxu0 0
    %224 = vmatpush1.bf16.msra.mxu0 0
    %225 = vmatprep.subr.bf16.mxu0 0
    %226 = vmatpush1.bf16.msra.mxu0 0
    %227 = vmatprep.subr.bf16.mxu0 0
    %228 = vmatpush1.bf16.msra.mxu0 0
    %229 = vmatprep.subr.bf16.mxu0 0
    %230 = vmatpush1.bf16.msra.mxu0 0
    %231 = vmatprep.subr.bf16.mxu0 0
    %232 = vmatpush1.bf16.msra.mxu0 0
    %233 = vmatprep.subr.bf16.mxu0 0
    %234 = vmatpush1.bf16.msra.mxu0 0
    %235 = vmatprep.subr.bf16.mxu0 0
    %236 = vmatpush1.bf16.msra.mxu0 0
    %237 = vmatprep.subr.bf16.mxu0 0
    %238 = vmatpush1.bf16.msra.mxu0 0
    %239 = vmatprep.subr.bf16.mxu0 0
    %240 = vmatpush1.bf16.msra.mxu0 0
    %241 = vmatprep.subr.bf16.mxu0 0
    %242 = vmatpush1.bf16.msra.mxu0 0
    %243 = vmatprep.subr.bf16.mxu0 0
    %244 = vmatpush1.bf16.msra.mxu0 0
    %245 = vmatprep.subr.bf16.mxu0 0
    %246 = vmatpush1.bf16.msra.mxu0 0
    %247 = vmatprep.mubr.bf16.mxu0 0
    %248 = vmatmul.mubr.bf16.gmra.mrb[0].mxu0 %v213
    %v249 = vpop.f32.mrb[0].mxu0
    %v250 = vadd.f32 %v180, %v249
    %v251 = vpop.f32.mrb[0].mxu0
    %v252 = vpop.f32.mrb[0].mxu0
    %v253 = vadd.f32 %v180, %v252
    %v254 = vpop.f32.mrb[0].mxu0
    %255 = vdwg.mxu0
    %s256 = scalar_lea.vmem [#allocation7], 32
    %v257 = vld [vmem:[%s256] sm:$0xf]
    %v258 = vld [vmem:[%s256 + $0x4] sm:$0xf]
    %v259 = vld [vmem:[%s256 + $0x8] sm:$0xf]
    %v260 = vld [vmem:[%s256 + $0xc] sm:$0xf]
    %v261 = vld [vmem:[%s256 + $0x10] sm:$0xf]
    %v262 = vld [vmem:[%s256 + $0x14] sm:$0xf]
    %v263 = vld [vmem:[%s256 + $0x18] sm:$0xf]
    %v264 = vld [vmem:[%s256 + $0x1c] sm:$0xf]
    %v273 = vunpack.c.l.b16 %v257
    %v274 = vunpack.c.l.b16 %v258
    %v275 = vunpack.c.l.b16 %v259
    %v276 = vunpack.c.l.b16 %v260
    %v277 = vunpack.c.l.b16 %v261
    %v278 = vunpack.c.l.b16 %v262
    %v279 = vunpack.c.l.b16 %v263
    %v280 = vunpack.c.l.b16 %v264
    %v281 = vpack.c.b16 %v274, %v273
    %v282 = vpack.c.b16 %v276, %v275
    %v283 = vpack.c.b16 %v278, %v277
    %v284 = vpack.c.b16 %v280, %v279
    %289 = vmatprep.subr.bf16.mxu0 0
    %290 = vmatpush1.bf16.msra.mxu0 %v281
    %291 = vmatprep.subr.bf16.mxu0 0
    %292 = vmatpush1.bf16.msra.mxu0 %v282
    %293 = vmatprep.subr.bf16.mxu0 0
    %294 = vmatpush1.bf16.msra.mxu0 %v283
    %295 = vmatprep.subr.bf16.mxu0 0
    %296 = vmatpush1.bf16.msra.mxu0 %v284
    %297 = vmatprep.subr.bf16.mxu0 0
    %298 = vmatpush1.bf16.msra.mxu0 0
    %299 = vmatprep.subr.bf16.mxu0 0
    %300 = vmatpush1.bf16.msra.mxu0 0
    %301 = vmatprep.subr.bf16.mxu0 0
    %302 = vmatpush1.bf16.msra.mxu0 0
    %303 = vmatprep.subr.bf16.mxu0 0
    %304 = vmatpush1.bf16.msra.mxu0 0
    %305 = vmatprep.subr.bf16.mxu0 0
    %306 = vmatpush1.bf16.msra.mxu0 0
    %307 = vmatprep.subr.bf16.mxu0 0
    %308 = vmatpush1.bf16.msra.mxu0 0
    %309 = vmatprep.subr.bf16.mxu0 0
    %310 = vmatpush1.bf16.msra.mxu0 0
    %311 = vmatprep.subr.bf16.mxu0 0
    %312 = vmatpush1.bf16.msra.mxu0 0
    %313 = vmatprep.subr.bf16.mxu0 0
    %314 = vmatpush1.bf16.msra.mxu0 0
    %315 = vmatprep.subr.bf16.mxu0 0
    %316 = vmatpush1.bf16.msra.mxu0 0
    %317 = vmatprep.subr.bf16.mxu0 0
    %318 = vmatpush1.bf16.msra.mxu0 0
    %319 = vmatprep.subr.bf16.mxu0 0
    %320 = vmatpush1.bf16.msra.mxu0 0
    %321 = vmatprep.mubr.bf16.mxu0 0
    %322 = vmatmul.mubr.bf16.gmra.mrb[0].mxu0 %v213
    %v323 = vpop.f32.mrb[0].mxu0
    %v324 = vadd.f32 %v180, %v323
    %v325 = vpop.f32.mrb[0].mxu0
    %v326 = vpop.f32.mrb[0].mxu0
    %v327 = vadd.f32 %v180, %v326
    %v328 = vpop.f32.mrb[0].mxu0
    %329 = vdwg.mxu0
    %v330 = vpack.c.bf16 %v253, %v250
    %v331 = vpack.c.bf16 %v327, %v324
    %v332 = vld [vmem:[#allocation5] sm:$0xf]
    %v333 = vld [vmem:[#allocation5 + $0x4] sm:$0xf]
    %v334 = vld [vmem:[#allocation5 + $0x8] sm:$0xf]
    %v335 = vld [vmem:[#allocation5 + $0xc] sm:$0xf]
    %v336 = vld [vmem:[#allocation10] sm:$0xf]
    %v337 = vld [vmem:[#allocation10 + $0x4] sm:$0xf]
    %v338 = vld [vmem:[#allocation10 + $0x8] sm:$0xf]
    %v339 = vld [vmem:[#allocation10 + $0xc] sm:$0xf]
    %v340 = vld [vmem:[#allocation10 + $0x10] sm:$0xf]
    %v341 = vld [vmem:[#allocation10 + $0x14] sm:$0xf]
    %v342 = vld [vmem:[#allocation10 + $0x18] sm:$0xf]
    %v343 = vld [vmem:[#allocation10 + $0x1c] sm:$0xf]
    %v344 = vld [vmem:[#allocation11] sm:$0xf]
    %v345 = vld [vmem:[#allocation11 + $0x4] sm:$0xf]
    %v346 = vld [vmem:[#allocation11 + $0x8] sm:$0xf]
    %v347 = vld [vmem:[#allocation11 + $0xc] sm:$0xf]
    %v348 = vld [vmem:[#allocation11 + $0x10] sm:$0xf]
    %v349 = vld [vmem:[#allocation11 + $0x14] sm:$0xf]
    %v350 = vld [vmem:[#allocation11 + $0x18] sm:$0xf]
    %v351 = vld [vmem:[#allocation11 + $0x1c] sm:$0xf]
    %v360 = vunpack.c.l.b16 %v344
    %v361 = vunpack.c.l.b16 %v345
    %v362 = vunpack.c.l.b16 %v346
    %v363 = vunpack.c.l.b16 %v347
    %v364 = vunpack.c.l.b16 %v348
    %v365 = vunpack.c.l.b16 %v349
    %v366 = vunpack.c.l.b16 %v350
    %v367 = vunpack.c.l.b16 %v351
    %v368 = vpack.c.b16 %v361, %v360
    %v369 = vpack.c.b16 %v363, %v362
    %v370 = vpack.c.b16 %v365, %v364
    %v371 = vpack.c.b16 %v367, %v366
    %v377 = vsel %vm211, %v330, 0
    %v380 = vsel %vm211, %v331, 0
    %382 = vmatprep.subr.bf16.mxu0 0
    %383 = vmatpush1.bf16.msra.mxu0 %v368
    %384 = vmatprep.subr.bf16.mxu0 0
    %385 = vmatpush1.bf16.msra.mxu0 %v369
    %386 = vmatprep.subr.bf16.mxu0 0
    %387 = vmatpush1.bf16.msra.mxu0 %v370
    %388 = vmatprep.subr.bf16.mxu0 0
    %389 = vmatpush1.bf16.msra.mxu0 %v371
    %390 = vmatprep.subr.bf16.mxu0 0
    %391 = vmatpush1.bf16.msra.mxu0 0
    %392 = vmatprep.subr.bf16.mxu0 0
    %393 = vmatpush1.bf16.msra.mxu0 0
    %394 = vmatprep.subr.bf16.mxu0 0
    %395 = vmatpush1.bf16.msra.mxu0 0
    %396 = vmatprep.subr.bf16.mxu0 0
    %397 = vmatpush1.bf16.msra.mxu0 0
    %398 = vmatprep.subr.bf16.mxu0 0
    %399 = vmatpush1.bf16.msra.mxu0 0
    %400 = vmatprep.subr.bf16.mxu0 0
    %401 = vmatpush1.bf16.msra.mxu0 0
    %402 = vmatprep.subr.bf16.mxu0 0
    %403 = vmatpush1.bf16.msra.mxu0 0
    %404 = vmatprep.subr.bf16.mxu0 0
    %405 = vmatpush1.bf16.msra.mxu0 0
    %406 = vmatprep.subr.bf16.mxu0 0
    %407 = vmatpush1.bf16.msra.mxu0 0
    %408 = vmatprep.subr.bf16.mxu0 0
    %409 = vmatpush1.bf16.msra.mxu0 0
    %410 = vmatprep.subr.bf16.mxu0 0
    %411 = vmatpush1.bf16.msra.mxu0 0
    %412 = vmatprep.subr.bf16.mxu0 0
    %413 = vmatpush1.bf16.msra.mxu0 0
    %414 = vmatprep.mubr.bf16.mxu0 0
    %415 = vmatmul.mubr.bf16.gmra.mrb[0].mxu0 %v377
    %v416 = vpop.f32.mrb[0].mxu0
    %v417 = vadd.f32 0.0, %v416
    %v418 = vpop.f32.mrb[0].mxu0
    %v419 = vpop.f32.mrb[0].mxu0
    %v420 = vadd.f32 0.0, %v419
    %v421 = vpop.f32.mrb[0].mxu0
    %422 = vmatprep.mubr.bf16.mxu0 0
    %423 = vmatmul.mubr.bf16.gmra.mrb[0].mxu0 %v380
    %v424 = vpop.f32.mrb[0].mxu0
    %v425 = vadd.f32 0.0, %v424
    %v426 = vpop.f32.mrb[0].mxu0
    %v427 = vpop.f32.mrb[0].mxu0
    %v428 = vadd.f32 0.0, %v427
    %v429 = vpop.f32.mrb[0].mxu0
    %430 = vdwg.mxu0
    %v435 = vunpack.c.l.b16 %v332
    %v436 = vunpack.c.l.b16 %v333
    %v437 = vunpack.c.l.b16 %v334
    %v438 = vunpack.c.l.b16 %v335
    %v439 = vpack.c.b16 %v436, %v435
    %v440 = vpack.c.b16 %v438, %v437
    %v449 = vunpack.c.l.b16 %v336
    %v450 = vunpack.c.l.b16 %v337
    %v451 = vunpack.c.l.b16 %v338
    %v452 = vunpack.c.l.b16 %v339
    %v453 = vunpack.c.l.b16 %v340
    %v454 = vunpack.c.l.b16 %v341
    %v455 = vunpack.c.l.b16 %v342
    %v456 = vunpack.c.l.b16 %v343
    %v457 = vpack.c.b16 %v450, %v449
    %v458 = vpack.c.b16 %v452, %v451
    %v459 = vpack.c.b16 %v454, %v453
    %v460 = vpack.c.b16 %v456, %v455
    %v466 = vsel %vm211, %v439, 0
    %v469 = vsel %vm211, %v440, 0
    %471 = vmatprep.subr.bf16.mxu0 0
    %472 = vmatpush1.bf16.msra.mxu0 %v457
    %473 = vmatprep.subr.bf16.mxu0 0
    %474 = vmatpush1.bf16.msra.mxu0 %v458
    %475 = vmatprep.subr.bf16.mxu0 0
    %476 = vmatpush1.bf16.msra.mxu0 %v459
    %477 = vmatprep.subr.bf16.mxu0 0
    %478 = vmatpush1.bf16.msra.mxu0 %v460
    %479 = vmatprep.subr.bf16.mxu0 0
    %480 = vmatpush1.bf16.msra.mxu0 0
    %481 = vmatprep.subr.bf16.mxu0 0
    %482 = vmatpush1.bf16.msra.mxu0 0
    %483 = vmatprep.subr.bf16.mxu0 0
    %484 = vmatpush1.bf16.msra.mxu0 0
    %485 = vmatprep.subr.bf16.mxu0 0
    %486 = vmatpush1.bf16.msra.mxu0 0
    %487 = vmatprep.subr.bf16.mxu0 0
    %488 = vmatpush1.bf16.msra.mxu0 0
    %489 = vmatprep.subr.bf16.mxu0 0
    %490 = vmatpush1.bf16.msra.mxu0 0
    %491 = vmatprep.subr.bf16.mxu0 0
    %492 = vmatpush1.bf16.msra.mxu0 0
    %493 = vmatprep.subr.bf16.mxu0 0
    %494 = vmatpush1.bf16.msra.mxu0 0
    %495 = vmatprep.subr.bf16.mxu0 0
    %496 = vmatpush1.bf16.msra.mxu0 0
    %497 = vmatprep.subr.bf16.mxu0 0
    %498 = vmatpush1.bf16.msra.mxu0 0
    %499 = vmatprep.subr.bf16.mxu0 0
    %500 = vmatpush1.bf16.msra.mxu0 0
    %501 = vmatprep.subr.bf16.mxu0 0
    %502 = vmatpush1.bf16.msra.mxu0 0
    %503 = vmatprep.mubr.bf16.mxu0 0
    %504 = vmatmul.mubr.bf16.gmra.mrb[0].mxu0 %v466
    %v505 = vpop.f32.mrb[0].mxu0
    %v506 = vadd.f32 %v417, %v505
    %v507 = vpop.f32.mrb[0].mxu0
    %v508 = vpop.f32.mrb[0].mxu0
    %v509 = vadd.f32 %v420, %v508
    %v510 = vpop.f32.mrb[0].mxu0
    %511 = vmatprep.mubr.bf16.mxu0 0
    %512 = vmatmul.mubr.bf16.gmra.mrb[0].mxu0 %v469
    %v513 = vpop.f32.mrb[0].mxu0
    %v514 = vadd.f32 %v425, %v513
    %v515 = vpop.f32.mrb[0].mxu0
    %v516 = vpop.f32.mrb[0].mxu0
    %v517 = vadd.f32 %v428, %v516
    %v518 = vpop.f32.mrb[0].mxu0
    %519 = vdwg.mxu0
    %s520 = scalar_lea.vmem [#allocation10], 32
    %v521 = vld [vmem:[%s520] sm:$0xf]
    %v522 = vld [vmem:[%s520 + $0x4] sm:$0xf]
    %v523 = vld [vmem:[%s520 + $0x8] sm:$0xf]
    %v524 = vld [vmem:[%s520 + $0xc] sm:$0xf]
    %v525 = vld [vmem:[%s520 + $0x10] sm:$0xf]
    %v526 = vld [vmem:[%s520 + $0x14] sm:$0xf]
    %v527 = vld [vmem:[%s520 + $0x18] sm:$0xf]
    %v528 = vld [vmem:[%s520 + $0x1c] sm:$0xf]
    %s529 = scalar_lea.vmem [#allocation11], 32
    %v530 = vld [vmem:[%s529] sm:$0xf]
    %v531 = vld [vmem:[%s529 + $0x4] sm:$0xf]
    %v532 = vld [vmem:[%s529 + $0x8] sm:$0xf]
    %v533 = vld [vmem:[%s529 + $0xc] sm:$0xf]
    %v534 = vld [vmem:[%s529 + $0x10] sm:$0xf]
    %v535 = vld [vmem:[%s529 + $0x14] sm:$0xf]
    %v536 = vld [vmem:[%s529 + $0x18] sm:$0xf]
    %v537 = vld [vmem:[%s529 + $0x1c] sm:$0xf]
    %v546 = vunpack.c.l.b16 %v530
    %v547 = vunpack.c.l.b16 %v531
    %v548 = vunpack.c.l.b16 %v532
    %v549 = vunpack.c.l.b16 %v533
    %v550 = vunpack.c.l.b16 %v534
    %v551 = vunpack.c.l.b16 %v535
    %v552 = vunpack.c.l.b16 %v536
    %v553 = vunpack.c.l.b16 %v537
    %v554 = vpack.c.b16 %v547, %v546
    %v555 = vpack.c.b16 %v549, %v548
    %v556 = vpack.c.b16 %v551, %v550
    %v557 = vpack.c.b16 %v553, %v552
    %562 = vmatprep.subr.bf16.mxu0 0
    %563 = vmatpush1.bf16.msra.mxu0 %v554
    %564 = vmatprep.subr.bf16.mxu0 0
    %565 = vmatpush1.bf16.msra.mxu0 %v555
    %566 = vmatprep.subr.bf16.mxu0 0
    %567 = vmatpush1.bf16.msra.mxu0 %v556
    %568 = vmatprep.subr.bf16.mxu0 0
    %569 = vmatpush1.bf16.msra.mxu0 %v557
    %570 = vmatprep.subr.bf16.mxu0 0
    %571 = vmatpush1.bf16.msra.mxu0 0
    %572 = vmatprep.subr.bf16.mxu0 0
    %573 = vmatpush1.bf16.msra.mxu0 0
    %574 = vmatprep.subr.bf16.mxu0 0
    %575 = vmatpush1.bf16.msra.mxu0 0
    %576 = vmatprep.subr.bf16.mxu0 0
    %577 = vmatpush1.bf16.msra.mxu0 0
    %578 = vmatprep.subr.bf16.mxu0 0
    %579 = vmatpush1.bf16.msra.mxu0 0
    %580 = vmatprep.subr.bf16.mxu0 0
    %581 = vmatpush1.bf16.msra.mxu0 0
    %582 = vmatprep.subr.bf16.mxu0 0
    %583 = vmatpush1.bf16.msra.mxu0 0
    %584 = vmatprep.subr.bf16.mxu0 0
    %585 = vmatpush1.bf16.msra.mxu0 0
    %586 = vmatprep.subr.bf16.mxu0 0
    %587 = vmatpush1.bf16.msra.mxu0 0
    %588 = vmatprep.subr.bf16.mxu0 0
    %589 = vmatpush1.bf16.msra.mxu0 0
    %590 = vmatprep.subr.bf16.mxu0 0
    %591 = vmatpush1.bf16.msra.mxu0 0
    %592 = vmatprep.subr.bf16.mxu0 0
    %593 = vmatpush1.bf16.msra.mxu0 0
    %594 = vmatprep.mubr.bf16.mxu0 0
    %595 = vmatmul.mubr.bf16.gmra.mrb[0].mxu0 %v377
    %v596 = vpop.f32.mrb[0].mxu0
    %v597 = vadd.f32 0.0, %v596
    %v598 = vpop.f32.mrb[0].mxu0
    %v599 = vpop.f32.mrb[0].mxu0
    %v600 = vadd.f32 0.0, %v599
    %v601 = vpop.f32.mrb[0].mxu0
    %602 = vmatprep.mubr.bf16.mxu0 0
    %603 = vmatmul.mubr.bf16.gmra.mrb[0].mxu0 %v380
    %v604 = vpop.f32.mrb[0].mxu0
    %v605 = vadd.f32 0.0, %v604
    %v606 = vpop.f32.mrb[0].mxu0
    %v607 = vpop.f32.mrb[0].mxu0
    %v608 = vadd.f32 0.0, %v607
    %v609 = vpop.f32.mrb[0].mxu0
    %610 = vdwg.mxu0
    %v619 = vunpack.c.l.b16 %v521
    %v620 = vunpack.c.l.b16 %v522
    %v621 = vunpack.c.l.b16 %v523
    %v622 = vunpack.c.l.b16 %v524
    %v623 = vunpack.c.l.b16 %v525
    %v624 = vunpack.c.l.b16 %v526
    %v625 = vunpack.c.l.b16 %v527
    %v626 = vunpack.c.l.b16 %v528
    %v627 = vpack.c.b16 %v620, %v619
    %v628 = vpack.c.b16 %v622, %v621
    %v629 = vpack.c.b16 %v624, %v623
    %v630 = vpack.c.b16 %v626, %v625
    %635 = vmatprep.subr.bf16.mxu0 0
    %636 = vmatpush1.bf16.msra.mxu0 %v627
    %637 = vmatprep.subr.bf16.mxu0 0
    %638 = vmatpush1.bf16.msra.mxu0 %v628
    %639 = vmatprep.subr.bf16.mxu0 0
    %640 = vmatpush1.bf16.msra.mxu0 %v629
    %641 = vmatprep.subr.bf16.mxu0 0
    %642 = vmatpush1.bf16.msra.mxu0 %v630
    %643 = vmatprep.subr.bf16.mxu0 0
    %644 = vmatpush1.bf16.msra.mxu0 0
    %645 = vmatprep.subr.bf16.mxu0 0
    %646 = vmatpush1.bf16.msra.mxu0 0
    %647 = vmatprep.subr.bf16.mxu0 0
    %648 = vmatpush1.bf16.msra.mxu0 0
    %649 = vmatprep.subr.bf16.mxu0 0
    %650 = vmatpush1.bf16.msra.mxu0 0
    %651 = vmatprep.subr.bf16.mxu0 0
    %652 = vmatpush1.bf16.msra.mxu0 0
    %653 = vmatprep.subr.bf16.mxu0 0
    %654 = vmatpush1.bf16.msra.mxu0 0
    %655 = vmatprep.subr.bf16.mxu0 0
    %656 = vmatpush1.bf16.msra.mxu0 0
    %657 = vmatprep.subr.bf16.mxu0 0
    %658 = vmatpush1.bf16.msra.mxu0 0
    %659 = vmatprep.subr.bf16.mxu0 0
    %660 = vmatpush1.bf16.msra.mxu0 0
    %661 = vmatprep.subr.bf16.mxu0 0
    %662 = vmatpush1.bf16.msra.mxu0 0
    %663 = vmatprep.subr.bf16.mxu0 0
    %664 = vmatpush1.bf16.msra.mxu0 0
    %665 = vmatprep.subr.bf16.mxu0 0
    %666 = vmatpush1.bf16.msra.mxu0 0
    %667 = vmatprep.mubr.bf16.mxu0 0
    %668 = vmatmul.mubr.bf16.gmra.mrb[0].mxu0 %v466
    %v669 = vpop.f32.mrb[0].mxu0
    %v670 = vadd.f32 %v597, %v669
    %v671 = vpop.f32.mrb[0].mxu0
    %v672 = vpop.f32.mrb[0].mxu0
    %v673 = vadd.f32 %v600, %v672
    %v674 = vpop.f32.mrb[0].mxu0
    %675 = vmatprep.mubr.bf16.mxu0 0
    %676 = vmatmul.mubr.bf16.gmra.mrb[0].mxu0 %v469
    %v677 = vpop.f32.mrb[0].mxu0
    %v678 = vadd.f32 %v605, %v677
    %v679 = vpop.f32.mrb[0].mxu0
    %v680 = vpop.f32.mrb[0].mxu0
    %v681 = vadd.f32 %v608, %v680
    %v682 = vpop.f32.mrb[0].mxu0
    %683 = vdwg.mxu0
    %s684 = scalar_lea.vmem [#allocation10], 64
    %v685 = vld [vmem:[%s684] sm:$0xf]
    %v686 = vld [vmem:[%s684 + $0x4] sm:$0xf]
    %v687 = vld [vmem:[%s684 + $0x8] sm:$0xf]
    %v688 = vld [vmem:[%s684 + $0xc] sm:$0xf]
    %v689 = vld [vmem:[%s684 + $0x10] sm:$0xf]
    %v690 = vld [vmem:[%s684 + $0x14] sm:$0xf]
    %v691 = vld [vmem:[%s684 + $0x18] sm:$0xf]
    %v692 = vld [vmem:[%s684 + $0x1c] sm:$0xf]
    %s693 = scalar_lea.vmem [#allocation11], 64
    %v694 = vld [vmem:[%s693] sm:$0xf]
    %v695 = vld [vmem:[%s693 + $0x4] sm:$0xf]
    %v696 = vld [vmem:[%s693 + $0x8] sm:$0xf]
    %v697 = vld [vmem:[%s693 + $0xc] sm:$0xf]
    %v698 = vld [vmem:[%s693 + $0x10] sm:$0xf]
    %v699 = vld [vmem:[%s693 + $0x14] sm:$0xf]
    %v700 = vld [vmem:[%s693 + $0x18] sm:$0xf]
    %v701 = vld [vmem:[%s693 + $0x1c] sm:$0xf]
    %v710 = vunpack.c.l.b16 %v694
    %v711 = vunpack.c.l.b16 %v695
    %v712 = vunpack.c.l.b16 %v696
    %v713 = vunpack.c.l.b16 %v697
    %v714 = vunpack.c.l.b16 %v698
    %v715 = vunpack.c.l.b16 %v699
    %v716 = vunpack.c.l.b16 %v700
    %v717 = vunpack.c.l.b16 %v701
    %v718 = vpack.c.b16 %v711, %v710
    %v719 = vpack.c.b16 %v713, %v712
    %v720 = vpack.c.b16 %v715, %v714
    %v721 = vpack.c.b16 %v717, %v716
    %726 = vmatprep.subr.bf16.mxu0 0
    %727 = vmatpush1.bf16.msra.mxu0 %v718
    %728 = vmatprep.subr.bf16.mxu0 0
    %729 = vmatpush1.bf16.msra.mxu0 %v719
    %730 = vmatprep.subr.bf16.mxu0 0
    %731 = vmatpush1.bf16.msra.mxu0 %v720
    %732 = vmatprep.subr.bf16.mxu0 0
    %733 = vmatpush1.bf16.msra.mxu0 %v721
    %734 = vmatprep.subr.bf16.mxu0 0
    %735 = vmatpush1.bf16.msra.mxu0 0
    %736 = vmatprep.subr.bf16.mxu0 0
    %737 = vmatpush1.bf16.msra.mxu0 0
    %738 = vmatprep.subr.bf16.mxu0 0
    %739 = vmatpush1.bf16.msra.mxu0 0
    %740 = vmatprep.subr.bf16.mxu0 0
    %741 = vmatpush1.bf16.msra.mxu0 0
    %742 = vmatprep.subr.bf16.mxu0 0
    %743 = vmatpush1.bf16.msra.mxu0 0
    %744 = vmatprep.subr.bf16.mxu0 0
    %745 = vmatpush1.bf16.msra.mxu0 0
    %746 = vmatprep.subr.bf16.mxu0 0
    %747 = vmatpush1.bf16.msra.mxu0 0
    %748 = vmatprep.subr.bf16.mxu0 0
    %749 = vmatpush1.bf16.msra.mxu0 0
    %750 = vmatprep.subr.bf16.mxu0 0
    %751 = vmatpush1.bf16.msra.mxu0 0
    %752 = vmatprep.subr.bf16.mxu0 0
    %753 = vmatpush1.bf16.msra.mxu0 0
    %754 = vmatprep.subr.bf16.mxu0 0
    %755 = vmatpush1.bf16.msra.mxu0 0
    %756 = vmatprep.subr.bf16.mxu0 0
    %757 = vmatpush1.bf16.msra.mxu0 0
    %758 = vmatprep.mubr.bf16.mxu0 0
    %759 = vmatmul.mubr.bf16.gmra.mrb[0].mxu0 %v377
    %v760 = vpop.f32.mrb[0].mxu0
    %v761 = vadd.f32 0.0, %v760
    %v762 = vpop.f32.mrb[0].mxu0
    %v763 = vpop.f32.mrb[0].mxu0
    %v764 = vadd.f32 0.0, %v763
    %v765 = vpop.f32.mrb[0].mxu0
    %766 = vmatprep.mubr.bf16.mxu0 0
    %767 = vmatmul.mubr.bf16.gmra.mrb[0].mxu0 %v380
    %v768 = vpop.f32.mrb[0].mxu0
    %v769 = vadd.f32 0.0, %v768
    %v770 = vpop.f32.mrb[0].mxu0
    %v771 = vpop.f32.mrb[0].mxu0
    %v772 = vadd.f32 0.0, %v771
    %v773 = vpop.f32.mrb[0].mxu0
    %774 = vdwg.mxu0
    %v783 = vunpack.c.l.b16 %v685
    %v784 = vunpack.c.l.b16 %v686
    %v785 = vunpack.c.l.b16 %v687
    %v786 = vunpack.c.l.b16 %v688
    %v787 = vunpack.c.l.b16 %v689
    %v788 = vunpack.c.l.b16 %v690
    %v789 = vunpack.c.l.b16 %v691
    %v790 = vunpack.c.l.b16 %v692
    %v791 = vpack.c.b16 %v784, %v783
    %v792 = vpack.c.b16 %v786, %v785
    %v793 = vpack.c.b16 %v788, %v787
    %v794 = vpack.c.b16 %v790, %v789
    %799 = vmatprep.subr.bf16.mxu0 0
    %800 = vmatpush1.bf16.msra.mxu0 %v791
    %801 = vmatprep.subr.bf16.mxu0 0
    %802 = vmatpush1.bf16.msra.mxu0 %v792
    %803 = vmatprep.subr.bf16.mxu0 0
    %804 = vmatpush1.bf16.msra.mxu0 %v793
    %805 = vmatprep.subr.bf16.mxu0 0
    %806 = vmatpush1.bf16.msra.mxu0 %v794
    %807 = vmatprep.subr.bf16.mxu0 0
    %808 = vmatpush1.bf16.msra.mxu0 0
    %809 = vmatprep.subr.bf16.mxu0 0
    %810 = vmatpush1.bf16.msra.mxu0 0
    %811 = vmatprep.subr.bf16.mxu0 0
    %812 = vmatpush1.bf16.msra.mxu0 0
    %813 = vmatprep.subr.bf16.mxu0 0
    %814 = vmatpush1.bf16.msra.mxu0 0
    %815 = vmatprep.subr.bf16.mxu0 0
    %816 = vmatpush1.bf16.msra.mxu0 0
    %817 = vmatprep.subr.bf16.mxu0 0
    %818 = vmatpush1.bf16.msra.mxu0 0
    %819 = vmatprep.subr.bf16.mxu0 0
    %820 = vmatpush1.bf16.msra.mxu0 0
    %821 = vmatprep.subr.bf16.mxu0 0
    %822 = vmatpush1.bf16.msra.mxu0 0
    %823 = vmatprep.subr.bf16.mxu0 0
    %824 = vmatpush1.bf16.msra.mxu0 0
    %825 = vmatprep.subr.bf16.mxu0 0
    %826 = vmatpush1.bf16.msra.mxu0 0
    %827 = vmatprep.subr.bf16.mxu0 0
    %828 = vmatpush1.bf16.msra.mxu0 0
    %829 = vmatprep.subr.bf16.mxu0 0
    %830 = vmatpush1.bf16.msra.mxu0 0
    %831 = vmatprep.mubr.bf16.mxu0 0
    %832 = vmatmul.mubr.bf16.gmra.mrb[0].mxu0 %v466
    %v833 = vpop.f32.mrb[0].mxu0
    %v834 = vadd.f32 %v761, %v833
    %v835 = vpop.f32.mrb[0].mxu0
    %v836 = vpop.f32.mrb[0].mxu0
    %v837 = vadd.f32 %v764, %v836
    %v838 = vpop.f32.mrb[0].mxu0
    %839 = vmatprep.mubr.bf16.mxu0 0
    %840 = vmatmul.mubr.bf16.gmra.mrb[0].mxu0 %v469
    %v841 = vpop.f32.mrb[0].mxu0
    %v842 = vadd.f32 %v769, %v841
    %v843 = vpop.f32.mrb[0].mxu0
    %v844 = vpop.f32.mrb[0].mxu0
    %v845 = vadd.f32 %v772, %v844
    %v846 = vpop.f32.mrb[0].mxu0
    %847 = vdwg.mxu0
    %v848 = vld [vmem:[#allocation13] sm:$0x1]
    %vm851 = vcmask 1040384
    %v852 = vrot.slane %v514, 7
    %v853 = vrot.slane %v517, 7
    %v854 = vsel %vm851, %v852, %v853
    %v857 = vsel %vm851, 0.0, %v852
    %v858 = vlaneseq
    %v859 = vshrl.u32 %v858, 7
    %v860 = vadd.s32 %v859, 8
    %vm861 = vcmp.lt.s32.totalorder %v859, 0
    %v862 = vsub.s32 0, %v859
    %v863 = vsel %vm861, %v862, %v859
    %v864 = vshrl.u32 %v863, 3
    %v865 = vand.u32 %v863, 7
    %v866 = vsub.s32 0, %v865
    %v867 = vsel %vm861, %v866, %v865
    %vm868 = vcmp.lt.s32.totalorder %v860, 0
    %v869 = vsub.s32 0, %v860
    %v870 = vsel %vm868, %v869, %v860
    %v871 = vshrl.u32 %v870, 3
    %v872 = vand.u32 %v870, 7
    %v873 = vsub.s32 0, %v872
    %v874 = vsel %vm868, %v873, %v872
    %vm875 = vcmp.ne.s32.totalorder %v867, 0
    %vm876 = vcmp.ne.s32.totalorder %v874, 0
    %vm877 = vcmp.lt.s32.totalorder %v867, 0
    %vm878 = vcmp.lt.s32.totalorder %v874, 0
    %vm879 = vmand %vm877, %vm875
    %vm880 = vmand %vm878, %vm876
    %v881 = vadd.s32 %v867, 8
    %v882 = vadd.s32 %v874, 8
    %v883 = vsel %vm879, %v881, %v867
    %v884 = vsel %vm880, %v882, %v874
    %vm885 = vcmp.eq.s32.totalorder %v883, 0
    %vm886 = vcmp.eq.s32.totalorder %v884, 0
    %v887 = vsel %vm885, 0.0, %v857
    %v888 = vsel %vm886, 0.0, %v854
    %v889 = vadd.f32 %v887, %v670
    %v890 = vadd.f32 %v888, %v673
    %v891 = vadd.f32 %v889, %v842
    %v892 = vadd.f32 %v890, %v845
    %v894 = vlaneseq
    %v895 = vshrl.u32 %v894, 7
    %v896 = vsub.s32 0, %v895
    %v897 = vrot.slane %v848, %v896
    %v899 = vadd.f32 %v891, %v897
    %v900 = vadd.f32 %v892, %v897
    %v901 = vmax.f32 %v899, 0.0
    %v902 = vmax.f32 %v900, 0.0
    %v903 = vadd.f32 %v506, %v678
    %v904 = vadd.f32 %v509, %v681
    %vm907 = vcmask 1046528
    %v908 = vrot.slane %v834, 1
    %v909 = vrot.slane %v837, 1
    %v910 = vsel %vm907, %v908, %v909
    %v913 = vsel %vm907, %v909, 0.0
    %vm914 = vcmp.eq.s32.totalorder %v883, 7
    %vm915 = vcmp.eq.s32.totalorder %v884, 7
    %v916 = vsel %vm914, 0.0, %v910
    %v917 = vsel %vm915, 0.0, %v913
    %v918 = vadd.f32 %v903, %v916
    %v919 = vadd.f32 %v904, %v917
    %v920 = vadd.f32 %v918, %v897
    %v921 = vadd.f32 %v919, %v897
    %v922 = vmax.f32 %v920, 0.0
    %v923 = vmax.f32 %v921, 0.0
    %v924 = vpack.c.bf16 %v902, %v901
    %v925 = vpack.c.bf16 %v923, %v922
    %v926 = vld [vmem:[#allocation14] sm:$0xf]
    %v927 = vld [vmem:[#allocation14 + $0x4] sm:$0xf]
    %v928 = vld [vmem:[#allocation14 + $0x8] sm:$0xf]
    %v929 = vld [vmem:[#allocation14 + $0xc] sm:$0xf]
    %v930 = vld [vmem:[#allocation14 + $0x10] sm:$0xf]
    %v931 = vld [vmem:[#allocation14 + $0x14] sm:$0xf]
    %v932 = vld [vmem:[#allocation14 + $0x18] sm:$0xf]
    %v933 = vld [vmem:[#allocation14 + $0x1c] sm:$0xf]
    %v942 = vunpack.c.l.b16 %v926
    %v943 = vunpack.c.l.b16 %v927
    %v944 = vunpack.c.l.b16 %v928
    %v945 = vunpack.c.l.b16 %v929
    %v946 = vunpack.c.l.b16 %v930
    %v947 = vunpack.c.l.b16 %v931
    %v948 = vunpack.c.l.b16 %v932
    %v949 = vunpack.c.l.b16 %v933
    %v950 = vpack.c.b16 %v943, %v942
    %v951 = vpack.c.b16 %v945, %v944
    %v952 = vpack.c.b16 %v947, %v946
    %v953 = vpack.c.b16 %v949, %v948
    %v959 = vsel %vm211, %v924, 0
    %v962 = vsel %vm211, %v925, 0
    %964 = vmatprep.subr.bf16.mxu0 0
    %965 = vmatpush1.bf16.msra.mxu0 %v950
    %966 = vmatprep.subr.bf16.mxu0 0
    %967 = vmatpush1.bf16.msra.mxu0 %v951
    %968 = vmatprep.subr.bf16.mxu0 0
    %969 = vmatpush1.bf16.msra.mxu0 %v952
    %970 = vmatprep.subr.bf16.mxu0 0
    %971 = vmatpush1.bf16.msra.mxu0 %v953
    %972 = vmatprep.subr.bf16.mxu0 0
    %973 = vmatpush1.bf16.msra.mxu0 0
    %974 = vmatprep.subr.bf16.mxu0 0
    %975 = vmatpush1.bf16.msra.mxu0 0
    %976 = vmatprep.subr.bf16.mxu0 0
    %977 = vmatpush1.bf16.msra.mxu0 0
    %978 = vmatprep.subr.bf16.mxu0 0
    %979 = vmatpush1.bf16.msra.mxu0 0
    %980 = vmatprep.subr.bf16.mxu0 0
    %981 = vmatpush1.bf16.msra.mxu0 0
    %982 = vmatprep.subr.bf16.mxu0 0
    %983 = vmatpush1.bf16.msra.mxu0 0
    %984 = vmatprep.subr.bf16.mxu0 0
    %985 = vmatpush1.bf16.msra.mxu0 0
    %986 = vmatprep.subr.bf16.mxu0 0
    %987 = vmatpush1.bf16.msra.mxu0 0
    %988 = vmatprep.subr.bf16.mxu0 0
    %989 = vmatpush1.bf16.msra.mxu0 0
    %990 = vmatprep.subr.bf16.mxu0 0
    %991 = vmatpush1.bf16.msra.mxu0 0
    %992 = vmatprep.subr.bf16.mxu0 0
    %993 = vmatpush1.bf16.msra.mxu0 0
    %994 = vmatprep.subr.bf16.mxu0 0
    %995 = vmatpush1.bf16.msra.mxu0 0
    %996 = vmatprep.mubr.bf16.mxu0 0
    %997 = vmatmul.mubr.bf16.gmra.mrb[0].mxu0 %v959
    %v998 = vpop.f32.mrb[0].mxu0
    %v999 = vadd.f32 0.0, %v998
    %v1000 = vpop.f32.mrb[0].mxu0
    %v1001 = vpop.f32.mrb[0].mxu0
    %v1002 = vadd.f32 0.0, %v1001
    %v1003 = vpop.f32.mrb[0].mxu0
    %1004 = vmatprep.mubr.bf16.mxu0 0
    %1005 = vmatmul.mubr.bf16.gmra.mrb[0].mxu0 %v962
    %v1006 = vpop.f32.mrb[0].mxu0
    %v1007 = vadd.f32 0.0, %v1006
    %v1008 = vpop.f32.mrb[0].mxu0
    %v1009 = vpop.f32.mrb[0].mxu0
    %v1010 = vadd.f32 0.0, %v1009
    %v1011 = vpop.f32.mrb[0].mxu0
    %1012 = vdwg.mxu0
    %s1013 = scalar_lea.vmem [#allocation14], 32
    %v1014 = vld [vmem:[%s1013] sm:$0xf]
    %v1015 = vld [vmem:[%s1013 + $0x4] sm:$0xf]
    %v1016 = vld [vmem:[%s1013 + $0x8] sm:$0xf]
    %v1017 = vld [vmem:[%s1013 + $0xc] sm:$0xf]
    %v1018 = vld [vmem:[%s1013 + $0x10] sm:$0xf]
    %v1019 = vld [vmem:[%s1013 + $0x14] sm:$0xf]
    %v1020 = vld [vmem:[%s1013 + $0x18] sm:$0xf]
    %v1021 = vld [vmem:[%s1013 + $0x1c] sm:$0xf]
    %v1030 = vunpack.c.l.b16 %v1014
    %v1031 = vunpack.c.l.b16 %v1015
    %v1032 = vunpack.c.l.b16 %v1016
    %v1033 = vunpack.c.l.b16 %v1017
    %v1034 = vunpack.c.l.b16 %v1018
    %v1035 = vunpack.c.l.b16 %v1019
    %v1036 = vunpack.c.l.b16 %v1020
    %v1037 = vunpack.c.l.b16 %v1021
    %v1038 = vpack.c.b16 %v1031, %v1030
    %v1039 = vpack.c.b16 %v1033, %v1032
    %v1040 = vpack.c.b16 %v1035, %v1034
    %v1041 = vpack.c.b16 %v1037, %v1036
    %1046 = vmatprep.subr.bf16.mxu0 0
    %1047 = vmatpush1.bf16.msra.mxu0 %v1038
    %1048 = vmatprep.subr.bf16.mxu0 0
    %1049 = vmatpush1.bf16.msra.mxu0 %v1039
    %1050 = vmatprep.subr.bf16.mxu0 0
    %1051 = vmatpush1.bf16.msra.mxu0 %v1040
    %1052 = vmatprep.subr.bf16.mxu0 0
    %1053 = vmatpush1.bf16.msra.mxu0 %v1041
    %1054 = vmatprep.subr.bf16.mxu0 0
    %1055 = vmatpush1.bf16.msra.mxu0 0
    %1056 = vmatprep.subr.bf16.mxu0 0
    %1057 = vmatpush1.bf16.msra.mxu0 0
    %1058 = vmatprep.subr.bf16.mxu0 0
    %1059 = vmatpush1.bf16.msra.mxu0 0
    %1060 = vmatprep.subr.bf16.mxu0 0
    %1061 = vmatpush1.bf16.msra.mxu0 0
    %1062 = vmatprep.subr.bf16.mxu0 0
    %1063 = vmatpush1.bf16.msra.mxu0 0
    %1064 = vmatprep.subr.bf16.mxu0 0
    %1065 = vmatpush1.bf16.msra.mxu0 0
    %1066 = vmatprep.subr.bf16.mxu0 0
    %1067 = vmatpush1.bf16.msra.mxu0 0
    %1068 = vmatprep.subr.bf16.mxu0 0
    %1069 = vmatpush1.bf16.msra.mxu0 0
    %1070 = vmatprep.subr.bf16.mxu0 0
    %1071 = vmatpush1.bf16.msra.mxu0 0
    %1072 = vmatprep.subr.bf16.mxu0 0
    %1073 = vmatpush1.bf16.msra.mxu0 0
    %1074 = vmatprep.subr.bf16.mxu0 0
    %1075 = vmatpush1.bf16.msra.mxu0 0
    %1076 = vmatprep.subr.bf16.mxu0 0
    %1077 = vmatpush1.bf16.msra.mxu0 0
    %1078 = vmatprep.mubr.bf16.mxu0 0
    %1079 = vmatmul.mubr.bf16.gmra.mrb[0].mxu0 %v959
    %v1080 = vpop.f32.mrb[0].mxu0
    %v1081 = vadd.f32 0.0, %v1080
    %v1082 = vpop.f32.mrb[0].mxu0
    %v1083 = vpop.f32.mrb[0].mxu0
    %v1084 = vadd.f32 0.0, %v1083
    %v1085 = vpop.f32.mrb[0].mxu0
    %1086 = vmatprep.mubr.bf16.mxu0 0
    %1087 = vmatmul.mubr.bf16.gmra.mrb[0].mxu0 %v962
    %v1088 = vpop.f32.mrb[0].mxu0
    %v1089 = vadd.f32 0.0, %v1088
    %v1090 = vpop.f32.mrb[0].mxu0
    %v1091 = vpop.f32.mrb[0].mxu0
    %v1092 = vadd.f32 0.0, %v1091
    %v1093 = vpop.f32.mrb[0].mxu0
    %1094 = vdwg.mxu0
    %s1095 = scalar_lea.vmem [#allocation14], 64
    %v1096 = vld [vmem:[%s1095] sm:$0xf]
    %v1097 = vld [vmem:[%s1095 + $0x4] sm:$0xf]
    %v1098 = vld [vmem:[%s1095 + $0x8] sm:$0xf]
    %v1099 = vld [vmem:[%s1095 + $0xc] sm:$0xf]
    %v1100 = vld [vmem:[%s1095 + $0x10] sm:$0xf]
    %v1101 = vld [vmem:[%s1095 + $0x14] sm:$0xf]
    %v1102 = vld [vmem:[%s1095 + $0x18] sm:$0xf]
    %v1103 = vld [vmem:[%s1095 + $0x1c] sm:$0xf]
    %v1112 = vunpack.c.l.b16 %v1096
    %v1113 = vunpack.c.l.b16 %v1097
    %v1114 = vunpack.c.l.b16 %v1098
    %v1115 = vunpack.c.l.b16 %v1099
    %v1116 = vunpack.c.l.b16 %v1100
    %v1117 = vunpack.c.l.b16 %v1101
    %v1118 = vunpack.c.l.b16 %v1102
    %v1119 = vunpack.c.l.b16 %v1103
    %v1120 = vpack.c.b16 %v1113, %v1112
    %v1121 = vpack.c.b16 %v1115, %v1114
    %v1122 = vpack.c.b16 %v1117, %v1116
    %v1123 = vpack.c.b16 %v1119, %v1118
    %1128 = vmatprep.subr.bf16.mxu0 0
    %1129 = vmatpush1.bf16.msra.mxu0 %v1120
    %1130 = vmatprep.subr.bf16.mxu0 0
    %1131 = vmatpush1.bf16.msra.mxu0 %v1121
    %1132 = vmatprep.subr.bf16.mxu0 0
    %1133 = vmatpush1.bf16.msra.mxu0 %v1122
    %1134 = vmatprep.subr.bf16.mxu0 0
    %1135 = vmatpush1.bf16.msra.mxu0 %v1123
    %1136 = vmatprep.subr.bf16.mxu0 0
    %1137 = vmatpush1.bf16.msra.mxu0 0
    %1138 = vmatprep.subr.bf16.mxu0 0
    %1139 = vmatpush1.bf16.msra.mxu0 0
    %1140 = vmatprep.subr.bf16.mxu0 0
    %1141 = vmatpush1.bf16.msra.mxu0 0
    %1142 = vmatprep.subr.bf16.mxu0 0
    %1143 = vmatpush1.bf16.msra.mxu0 0
    %1144 = vmatprep.subr.bf16.mxu0 0
    %1145 = vmatpush1.bf16.msra.mxu0 0
    %1146 = vmatprep.subr.bf16.mxu0 0
    %1147 = vmatpush1.bf16.msra.mxu0 0
    %1148 = vmatprep.subr.bf16.mxu0 0
    %1149 = vmatpush1.bf16.msra.mxu0 0
    %1150 = vmatprep.subr.bf16.mxu0 0
    %1151 = vmatpush1.bf16.msra.mxu0 0
    %1152 = vmatprep.subr.bf16.mxu0 0
    %1153 = vmatpush1.bf16.msra.mxu0 0
    %1154 = vmatprep.subr.bf16.mxu0 0
    %1155 = vmatpush1.bf16.msra.mxu0 0
    %1156 = vmatprep.subr.bf16.mxu0 0
    %1157 = vmatpush1.bf16.msra.mxu0 0
    %1158 = vmatprep.subr.bf16.mxu0 0
    %1159 = vmatpush1.bf16.msra.mxu0 0
    %1160 = vmatprep.mubr.bf16.mxu0 0
    %1161 = vmatmul.mubr.bf16.gmra.mrb[0].mxu0 %v959
    %v1162 = vpop.f32.mrb[0].mxu0
    %v1163 = vadd.f32 0.0, %v1162
    %v1164 = vpop.f32.mrb[0].mxu0
    %v1165 = vpop.f32.mrb[0].mxu0
    %v1166 = vadd.f32 0.0, %v1165
    %v1167 = vpop.f32.mrb[0].mxu0
    %1168 = vmatprep.mubr.bf16.mxu0 0
    %1169 = vmatmul.mubr.bf16.gmra.mrb[0].mxu0 %v962
    %v1170 = vpop.f32.mrb[0].mxu0
    %v1171 = vadd.f32 0.0, %v1170
    %v1172 = vpop.f32.mrb[0].mxu0
    %v1173 = vpop.f32.mrb[0].mxu0
    %v1174 = vadd.f32 0.0, %v1173
    %v1175 = vpop.f32.mrb[0].mxu0
    %1176 = vdwg.mxu0
    %v1179 = vrot.slane %v1007, 7
    %v1180 = vrot.slane %v1010, 7
    %v1181 = vsel %vm851, %v1179, %v1180
    %v1184 = vsel %vm851, 0.0, %v1179
    %v1185 = vsel %vm885, 0.0, %v1184
    %v1186 = vsel %vm886, 0.0, %v1181
    %v1187 = vadd.f32 %v1185, %v1081
    %v1188 = vadd.f32 %v1186, %v1084
    %v1189 = vadd.f32 %v1187, %v1171
    %v1190 = vadd.f32 %v1188, %v1174
    %v1191 = vadd.f32 %v999, %v1089
    %v1192 = vadd.f32 %v1002, %v1092
    %v1195 = vrot.slane %v1163, 1
    %v1196 = vrot.slane %v1166, 1
    %v1197 = vsel %vm907, %v1195, %v1196
    %v1200 = vsel %vm907, %v1196, 0.0
    %v1201 = vsel %vm914, 0.0, %v1197
    %v1202 = vsel %vm915, 0.0, %v1200
    %v1203 = vadd.f32 %v1191, %v1201
    %v1204 = vadd.f32 %v1192, %v1202
    %1207 = vrot.lane.b32.xlu0 %v1203, 64
    %v1208 = vpop.permute.xlu0 %1207
    %1209 = vrot.lane.b32.xlu0 %v1204, 64
    %v1210 = vpop.permute.xlu0 %1209
    %v1213 = vsel %vm211, %v1189, %v1208
    %v1214 = vsel %vm211, %v1190, %v1210
    %v1215 = vld [vmem:[#allocation16] sm:$0x1]
    %v1217 = vlaneseq
    %v1218 = vshrl.u32 %v1217, 7
    %v1219 = vsub.s32 0, %v1218
    %v1220 = vrot.slane %v1215, %v1219
    %v1222 = vmul.f32 %v1213, %v1220
    %v1223 = vmul.f32 %v1214, %v1220
    %v1224 = vld [vmem:[#allocation17] sm:$0x1]
    %v1226 = vlaneseq
    %v1227 = vshrl.u32 %v1226, 7
    %v1228 = vsub.s32 0, %v1227
    %v1229 = vrot.slane %v1224, %v1228
    %v1231 = vadd.f32 %v1222, %v1229
    %v1232 = vadd.f32 %v1223, %v1229
    %v1233 = vmax.f32 %v1231, 0.0
    %v1234 = vmax.f32 %v1232, 0.0
    %1235 = vst [vmem:[#allocation19] sm:$0xff] %v1233
    %1236 = vst [vmem:[#allocation19 + $0x8] sm:$0xff] %v1234
    // Predicated region
    $region82: #{upblock_forward.1} parent=1 // pred_check
      _
    $region83: #{upblock_forward.1} parent=1 // pred_check_branch
      %1238 = sbr.rel (0) target = $region85
    $region84: #{upblock_forward.1} parent=1 // pred_region
      %s1240 = ssub.s32 256, 256
      %1241 = vsyncadd [#allocation4], %s1240
      %s1242 = sshll.u32 [#allocation19], 4
      %s1243 = int_to_ptr.vmem [resolvable:$true] %s1242
      %1248 = dma.vmem_to_hbm [thread:$0]  %s1243, 256, %s10, [#allocation4], 128, 128, 8
    $region85: #{upblock_forward.1} parent=1 // pred_fallthru
      _
    // Predicated region
    $region86: #{upblock_forward.1} parent=1 // pred_check
      _
    $region87: #{upblock_forward.1} parent=1 // pred_check_branch
      %1250 = sbr.rel (0) target = $region89
    $region88: #{upblock_forward.1} parent=1 // pred_region
      %1251 = dma.done [#allocation4], 256
    $region89: #{upblock_forward.1} parent=1 // pred_fallthru
      _
    %1252 = vsyncpa [#allocation3], 1
    %1253 = vsyncpa [#allocation6], 1
    %1254 = vsyncpa [#allocation9], 1
    %1255 = vsyncpa [#allocation12], 1
    %1256 = vsyncpa [#allocation15], 1
    %1257 = vsyncpa [#allocation18], 1
    %1258 = vsyncpa [#allocation4], 1

</llo_original>
